<compile_context>
chip_gen: v7x
topology: tpu7x:2x2x1
jax: 0.10.0
libtpu: 0.0.40
codegen_flags: <defaults>
</compile_context>

<pallas_src>
import jax
import jax.numpy as jnp
import numpy as np
from jax.experimental import pallas as pl
from jax.experimental.pallas import tpu as pltpu

# ----------------------------- configuration ---------------------------------
B = 2          # logical batch
F = 3          # input feature dim (mass, angle, friction)
HID = 64       # logical hidden size (must be divisible by 64 in image mode)
HP = 128       # padded hidden size (lane-aligned gate slices)
T = 8          # output_seq_len
IMG_H, IMG_W = 16, 16
HW = IMG_H * IMG_W
BP = 8         # sublane-padded batch used inside the kernel


def _sigmoid(x):
    # sigmoid(x) == 0.5 * tanh(0.5 * x) + 0.5  -> single EUP pass (vs exp + recip).
    return 0.5 * jnp.tanh(0.5 * x) + 0.5


# ------------------------------- kernel --------------------------------------
def encdec_kernel(
    x_ref,                    # [BP, F+1]   (last feature is a constant 1 -> folds b1)
    w1_ref,                   # [F+1, HID]  ([w1; b1])
    w2_ref, b2_ref,           # [HID, HID], [1, HID]
    w3ih_ref,                 # [HID, 4*HP]  = W3 @ Wih_enc (gate order i|f|o|g, padded)
    ih_rows_ref,              # [2, 4*HP]    row0 = b3@Wih_enc + b_ih + b_hh, row1 = w_time
    whh_ref,                  # [HP, 4*HP]
    wo_ref, bo_ref,           # [HP, HW], [1, HW]
    out_ref,                  # [T*BP, HW]   (row = t*BP + b)
):
    bsz = x_ref.shape[0]
    hp = whh_ref.shape[0]
    g4 = whh_ref.shape[1]
    n_t = out_ref.shape[0] // bsz
    denom = float(max(n_t - 1, 1))            # T == 1 -> linspace(0,1,1) == [0.0]

    # ---- encoder MLP: (Linear+ReLU) x2; layer-1 bias folded into w1 ----
    h1 = jnp.maximum(
        jnp.dot(x_ref[...], w1_ref[...], preferred_element_type=jnp.float32), 0.0)
    h2 = jnp.maximum(
        jnp.dot(h1, w2_ref[...], preferred_element_type=jnp.float32) + b2_ref[...], 0.0)

    # ---- LSTM input pre-activation; encoder Linear #3 fused host-side into w3ih ----
    pre_ih = (jnp.dot(h2, w3ih_ref[...], preferred_element_type=jnp.float32)
              + ih_rows_ref[0:1, :])                                     # [BP, 4*HP]
    # Hoist the broadcast once (JAX does not CSE broadcast_in_dim inside the loop).
    w_time = jnp.broadcast_to(ih_rows_ref[1:2, :], (bsz, g4))            # [BP, 4*HP]

    h = jnp.zeros((bsz, hp), jnp.float32)
    c = jnp.zeros((bsz, hp), jnp.float32)
    hs = []

    # ---- fully unrolled LSTM recurrence: only the (h, c) update is serial ----
    # TODO(synk): if the bundle dump shows Whh re-streamed into the MXU every step,
    # stage it once with pltpu.matmul_push_rhs/matmul_acc_lhs/matmul_pop.
    for t in range(n_t):
        gates = (pre_ih
                 + (float(t) / denom) * w_time
                 + jnp.dot(h, whh_ref[...], preferred_element_type=jnp.float32))
        # Gate layout [i | f | o | g], each HP lanes -> lane-aligned free slices;
        # the three sigmoid gates are one contiguous 384-lane EUP chunk.
        s3 = _sigmoid(gates[:, 0:3 * hp])
        i_g = s3[:, 0 * hp:1 * hp]
        f_g = s3[:, 1 * hp:2 * hp]
        o_g = s3[:, 2 * hp:3 * hp]
        g_g = jnp.tanh(gates[:, 3 * hp:4 * hp])
        c = f_g * c + i_g * g_g
        h = o_g * jnp.tanh(c)
        hs.append(h)                           # stays in vregs; no VMEM round-trip

    # ---- deferred output projection: one matmul + one sigmoid + one dense store ----
    hs_all = jnp.concatenate(hs, axis=0)                                 # [T*BP, HP]
    frames = (jnp.dot(hs_all, wo_ref[...], preferred_element_type=jnp.float32)
              + bo_ref[...])                                             # [T*BP, HW]
    out_ref[...] = _sigmoid(frames)


# --------------------------- host-side weight repacking -------------------------
def _regroup_and_pad_gates(a, hid=HID, hp=HP):
    """[..., 4*hid] in PyTorch gate order (i, f, g, o)
       -> [..., 4*hp] in kernel gate order (i, f, o, g), each gate zero-padded to hp."""
    parts = a.reshape(a.shape[:-1] + (4, hid))
    parts = jnp.pad(parts, [(0, 0)] * (parts.ndim - 1) + [(0, hp - hid)])
    parts = jnp.stack(
        [parts[..., 0, :], parts[..., 1, :], parts[..., 3, :], parts[..., 2, :]], axis=-2)
    return parts.reshape(a.shape[:-1] + (4 * hp,))


# ------------------------------- wrapper --------------------------------------
@jax.jit
def encoder_decoder_forward(x, params):
    """x: [B, F] float32  ->  [B, T, IMG_H, IMG_W] float32."""
    b = x.shape[0]
    bp = max(BP, ((b + 7) // 8) * 8)           # fill all 8 sublanes

    # Batch pad (zeros) + ones feature so layer-1 bias folds into w1.
    x_p = jnp.pad(x, ((0, bp - b), (0, 0)))
    x_aug = jnp.concatenate([x_p, jnp.ones((bp, 1), jnp.float32)], axis=1)   # [bp, F+1]
    w1a = jnp.concatenate([params["w1"], params["b1"]], axis=0)              # [F+1, HID]

    # Gate regroup/pad + fuse encoder Linear #3 into the LSTM input projection.
    wih_enc_p = _regroup_and_pad_gates(params["wih_enc"])                    # [HID, 4*HP]
    w3ih = params["w3"] @ wih_enc_p                                          # [HID, 4*HP]
    b_fused = (params["b3"] @ wih_enc_p
               + _regroup_and_pad_gates(params["bih"] + params["bhh"]))      # [1, 4*HP]
    wih_time_p = _regroup_and_pad_gates(params["wih_time"])                  # [1, 4*HP]
    ih_rows = jnp.concatenate([b_fused, wih_time_p], axis=0)                 # [2, 4*HP]

    whh_p = jnp.pad(_regroup_and_pad_gates(params["whh"]),
                    ((0, HP - HID), (0, 0)))                                 # [HP, 4*HP]
    wo_p = jnp.pad(params["wo"], ((0, HP - HID), (0, 0)))                    # [HP, HW]

    args = (x_aug, w1a, params["w2"], params["b2"], w3ih, ih_rows,
            whh_p, wo_p, params["bo"])

    vmem = pl.BlockSpec(memory_space=pltpu.MemorySpace.VMEM)
    # Gridless single-program kernel: total resident weights + activations < 1 MiB,
    # well inside VMEM on v5e/v6e/v7x.  For many independent samples on v7x, add a
    # leading sample-block grid axis with dimension_semantics=("parallel",).
    out = pl.pallas_call(
        encdec_kernel,
        out_shape=jax.ShapeDtypeStruct((T * bp, HW), jnp.float32),
        in_specs=[vmem] * len(args),
        out_specs=vmem,
    )(*args)
    # rows are (t, b)-major -> [B, T, H, W]; drop the padded batch rows.
    return out.reshape(T, bp, IMG_H, IMG_W)[:, :b].transpose(1, 0, 2, 3)


# --------------------------- deterministic params ------------------------------
def init_params(key):
    ks = jax.random.split(key, 16)

    def lin(kw, kb, fan_in, fan_out):
        bound = 1.0 / np.sqrt(fan_in)
        w = jax.random.uniform(kw, (fan_in, fan_out), jnp.float32, -bound, bound)
        b = jax.random.uniform(kb, (1, fan_out), jnp.float32, -bound, bound)
        return w, b

    w1, b1 = lin(ks[0], ks[1], F, HID)
    w2, b2 = lin(ks[2], ks[3], HID, HID)
    w3, b3 = lin(ks[4], ks[5], HID, HID)

    bound = 1.0 / np.sqrt(HID)
    # PyTorch LSTM weight_ih_l0 is [4H, H+1]; store transposed, split the time column.
    wih = jax.random.uniform(ks[6], (HID + 1, 4 * HID), jnp.float32, -bound, bound)
    wih_enc, wih_time = wih[:HID, :], wih[HID:HID + 1, :]
    whh = jax.random.uniform(ks[7], (HID, 4 * HID), jnp.float32, -bound, bound)
    bih = jax.random.uniform(ks[8], (1, 4 * HID), jnp.float32, -bound, bound)
    bhh = jax.random.uniform(ks[9], (1, 4 * HID), jnp.float32, -bound, bound)

    wo, bo = lin(ks[10], ks[11], HID, HW)

    return dict(w1=w1, b1=b1, w2=w2, b2=b2, w3=w3, b3=b3,
                wih_enc=wih_enc, wih_time=wih_time, whh=whh, bih=bih, bhh=bhh,
                wo=wo, bo=bo)


# ------------------------------ pure-JAX reference ------------------------------
def reference_forward(x, p):
    bsz = x.shape[0]
    h1 = jnp.maximum(x @ p["w1"] + p["b1"], 0.0)
    h2 = jnp.maximum(h1 @ p["w2"] + p["b2"], 0.0)
    enc = h2 @ p["w3"] + p["b3"]
    wih_full = jnp.concatenate([p["wih_enc"], p["wih_time"]], axis=0)
    h = jnp.zeros((bsz, HID), jnp.float32)
    c = jnp.zeros((bsz, HID), jnp.float32)
    frames = []
    for t in range(T):
        tfrac = t / (T - 1) if T > 1 else 0.0
        xin = jnp.concatenate([enc, jnp.full((bsz, 1), tfrac, jnp.float32)], axis=-1)
        gates = xin @ wih_full + p["bih"] + p["bhh"] + h @ p["whh"]
        i_g = jax.nn.sigmoid(gates[:, 0 * HID:1 * HID])
        f_g = jax.nn.sigmoid(gates[:, 1 * HID:2 * HID])
        g_g = jnp.tanh(gates[:, 2 * HID:3 * HID])
        o_g = jax.nn.sigmoid(gates[:, 3 * HID:4 * HID])
        c = f_g * c + i_g * g_g
        h = o_g * jnp.tanh(c)
        frames.append(jax.nn.sigmoid(h @ p["wo"] + p["bo"]))
    return jnp.stack(frames, axis=1).reshape(bsz, T, IMG_H, IMG_W)


# ----------------------------------- main ---------------------------------------
if __name__ == "__main__":
    key = jax.random.PRNGKey(0)
    k_param, k_x = jax.random.split(key)
    params = init_params(k_param)
    x = jax.random.uniform(k_x, (B, F), jnp.float32)   # normalized mass/angle/friction

    out = encoder_decoder_forward(x, params)
    out = jax.block_until_ready(out)

    ref = jax.block_until_ready(reference_forward(x, params))
    # Tolerance 1e-4: the host-side W3·Wih fusion and the tanh-form sigmoid change
    # f32 rounding/association slightly relative to the straight-line reference.
    np.testing.assert_allclose(np.asarray(out), np.asarray(ref), atol=1e-4, rtol=1e-4)
    assert out.shape == (B, T, IMG_H, IMG_W)

    print("KERNEL_OK")
</pallas_src>

<mosaic_0001>
module attributes {stable_mosaic.version = 11 : i64} {
  func.func @encdec_kernel(%arg0: memref<8x4xf32, #tpu.memory_space<vmem>>, %arg1: memref<4x64xf32, #tpu.memory_space<vmem>>, %arg2: memref<64x64xf32, #tpu.memory_space<vmem>>, %arg3: memref<1x64xf32, #tpu.memory_space<vmem>>, %arg4: memref<64x512xf32, #tpu.memory_space<vmem>>, %arg5: memref<2x512xf32, #tpu.memory_space<vmem>>, %arg6: memref<128x512xf32, #tpu.memory_space<vmem>>, %arg7: memref<128x256xf32, #tpu.memory_space<vmem>>, %arg8: memref<1x256xf32, #tpu.memory_space<vmem>>, %arg9: memref<64x256xf32, #tpu.memory_space<vmem>>) attributes {dimension_semantics = [], scalar_prefetch = 0 : i64, scratch_operands = 0 : i64, tpu.core_type = #tpu.core_type<tc>} {
    %c0 = arith.constant 0 : index
    %c0_0 = arith.constant 0 : index
    %0 = vector.load %arg0[%c0, %c0_0] : memref<8x4xf32, #tpu.memory_space<vmem>>, vector<8x4xf32>
    %c0_1 = arith.constant 0 : index
    %c0_2 = arith.constant 0 : index
    %1 = vector.load %arg1[%c0_1, %c0_2] : memref<4x64xf32, #tpu.memory_space<vmem>>, vector<4x64xf32>
    %cst = arith.constant dense<0.000000e+00> : vector<8x64xf32>
    %2 = tpu.matmul %0, %1, %cst {dimension_numbers = #tpu.dot_dimension_numbers<[1], [0], [0], [1], [0, 0, 1, 1], [], []>} : vector<8x4xf32>, vector<4x64xf32>, vector<8x64xf32> -> vector<8x64xf32>
    %cst_3 = arith.constant 0.000000e+00 : f32
    %3 = vector.broadcast %cst_3 : f32 to vector<8x64xf32>
    %4 = arith.maximumf %2, %3 : vector<8x64xf32>
    %c0_4 = arith.constant 0 : index
    %c0_5 = arith.constant 0 : index
    %5 = vector.load %arg2[%c0_4, %c0_5] : memref<64x64xf32, #tpu.memory_space<vmem>>, vector<64x64xf32>
    %cst_6 = arith.constant dense<0.000000e+00> : vector<8x64xf32>
    %6 = tpu.matmul %4, %5, %cst_6 {dimension_numbers = #tpu.dot_dimension_numbers<[1], [0], [0], [1], [0, 0, 1, 1], [], []>} : vector<8x64xf32>, vector<64x64xf32>, vector<8x64xf32> -> vector<8x64xf32>
    %c0_7 = arith.constant 0 : index
    %c0_8 = arith.constant 0 : index
    %7 = vector.load %arg3[%c0_7, %c0_8] : memref<1x64xf32, #tpu.memory_space<vmem>>, vector<1x64xf32>
    %8 = vector.broadcast %7 : vector<1x64xf32> to vector<8x64xf32>
    %9 = arith.addf %6, %8 : vector<8x64xf32>
    %cst_9 = arith.constant 0.000000e+00 : f32
    %10 = vector.broadcast %cst_9 : f32 to vector<8x64xf32>
    %11 = arith.maximumf %9, %10 : vector<8x64xf32>
    %c0_10 = arith.constant 0 : index
    %c0_11 = arith.constant 0 : index
    %12 = vector.load %arg4[%c0_10, %c0_11] : memref<64x512xf32, #tpu.memory_space<vmem>>, vector<64x512xf32>
    %cst_12 = arith.constant dense<0.000000e+00> : vector<8x512xf32>
    %13 = tpu.matmul %11, %12, %cst_12 {dimension_numbers = #tpu.dot_dimension_numbers<[1], [0], [0], [1], [0, 0, 1, 1], [], []>} : vector<8x64xf32>, vector<64x512xf32>, vector<8x512xf32> -> vector<8x512xf32>
    %c0_13 = arith.constant 0 : index
    %c0_14 = arith.constant 0 : index
    %14 = vector.load %arg5[%c0_13, %c0_14] : memref<2x512xf32, #tpu.memory_space<vmem>>, vector<1x512xf32>
    %15 = vector.broadcast %14 : vector<1x512xf32> to vector<8x512xf32>
    %16 = arith.addf %13, %15 : vector<8x512xf32>
    %c1 = arith.constant 1 : index
    %c0_15 = arith.constant 0 : index
    %17 = vector.load %arg5[%c1, %c0_15] : memref<2x512xf32, #tpu.memory_space<vmem>>, vector<1x512xf32>
    %18 = vector.shape_cast %17 : vector<1x512xf32> to vector<1x512xf32>
    %19 = vector.broadcast %18 : vector<1x512xf32> to vector<8x512xf32>
    %cst_16 = arith.constant 0.000000e+00 : f32
    %20 = vector.broadcast %cst_16 : f32 to vector<8x128xf32>
    %cst_17 = arith.constant 0.000000e+00 : f32
    %21 = vector.broadcast %cst_17 : f32 to vector<8x128xf32>
    %cst_18 = arith.constant 0.000000e+00 : f32
    %22 = vector.broadcast %cst_18 : f32 to vector<8x512xf32>
    %23 = arith.mulf %22, %19 : vector<8x512xf32>
    %24 = arith.addf %16, %23 : vector<8x512xf32>
    %c0_19 = arith.constant 0 : index
    %c0_20 = arith.constant 0 : index
    %25 = vector.load %arg6[%c0_19, %c0_20] : memref<128x512xf32, #tpu.memory_space<vmem>>, vector<128x512xf32>
    %cst_21 = arith.constant dense<0.000000e+00> : vector<8x512xf32>
    %26 = tpu.matmul %20, %25, %cst_21 {dimension_numbers = #tpu.dot_dimension_numbers<[1], [0], [0], [1], [0, 0, 1, 1], [], []>} : vector<8x128xf32>, vector<128x512xf32>, vector<8x512xf32> -> vector<8x512xf32>
    %27 = arith.addf %24, %26 : vector<8x512xf32>
    %28 = vector.extract_strided_slice %27 {offsets = [0, 0], sizes = [8, 384], strides = [1, 1]} : vector<8x512xf32> to vector<8x384xf32>
    %cst_22 = arith.constant 5.000000e-01 : f32
    %29 = vector.broadcast %cst_22 : f32 to vector<8x384xf32>
    %30 = arith.mulf %29, %28 : vector<8x384xf32>
    %31 = math.tanh %30 : vector<8x384xf32>
    %cst_23 = arith.constant 5.000000e-01 : f32
    %32 = vector.broadcast %cst_23 : f32 to vector<8x384xf32>
    %33 = arith.mulf %32, %31 : vector<8x384xf32>
    %cst_24 = arith.constant 5.000000e-01 : f32
    %34 = vector.broadcast %cst_24 : f32 to vector<8x384xf32>
    %35 = arith.addf %33, %34 : vector<8x384xf32>
    %36 = vector.extract_strided_slice %35 {offsets = [0, 0], sizes = [8, 128], strides = [1, 1]} : vector<8x384xf32> to vector<8x128xf32>
    %37 = vector.extract_strided_slice %35 {offsets = [0, 128], sizes = [8, 128], strides = [1, 1]} : vector<8x384xf32> to vector<8x128xf32>
    %38 = vector.extract_strided_slice %35 {offsets = [0, 256], sizes = [8, 128], strides = [1, 1]} : vector<8x384xf32> to vector<8x128xf32>
    %39 = vector.extract_strided_slice %27 {offsets = [0, 384], sizes = [8, 128], strides = [1, 1]} : vector<8x512xf32> to vector<8x128xf32>
    %40 = math.tanh %39 : vector<8x128xf32>
    %41 = arith.mulf %37, %21 : vector<8x128xf32>
    %42 = arith.mulf %36, %40 : vector<8x128xf32>
    %43 = arith.addf %41, %42 : vector<8x128xf32>
    %44 = math.tanh %43 : vector<8x128xf32>
    %45 = arith.mulf %38, %44 : vector<8x128xf32>
    %cst_25 = arith.constant 0.142857149 : f32
    %46 = vector.broadcast %cst_25 : f32 to vector<8x512xf32>
    %47 = arith.mulf %46, %19 : vector<8x512xf32>
    %48 = arith.addf %16, %47 : vector<8x512xf32>
    %c0_26 = arith.constant 0 : index
    %c0_27 = arith.constant 0 : index
    %49 = vector.load %arg6[%c0_26, %c0_27] : memref<128x512xf32, #tpu.memory_space<vmem>>, vector<128x512xf32>
    %cst_28 = arith.constant dense<0.000000e+00> : vector<8x512xf32>
    %50 = tpu.matmul %45, %49, %cst_28 {dimension_numbers = #tpu.dot_dimension_numbers<[1], [0], [0], [1], [0, 0, 1, 1], [], []>} : vector<8x128xf32>, vector<128x512xf32>, vector<8x512xf32> -> vector<8x512xf32>
    %51 = arith.addf %48, %50 : vector<8x512xf32>
    %52 = vector.extract_strided_slice %51 {offsets = [0, 0], sizes = [8, 384], strides = [1, 1]} : vector<8x512xf32> to vector<8x384xf32>
    %cst_29 = arith.constant 5.000000e-01 : f32
    %53 = vector.broadcast %cst_29 : f32 to vector<8x384xf32>
    %54 = arith.mulf %53, %52 : vector<8x384xf32>
    %55 = math.tanh %54 : vector<8x384xf32>
    %cst_30 = arith.constant 5.000000e-01 : f32
    %56 = vector.broadcast %cst_30 : f32 to vector<8x384xf32>
    %57 = arith.mulf %56, %55 : vector<8x384xf32>
    %cst_31 = arith.constant 5.000000e-01 : f32
    %58 = vector.broadcast %cst_31 : f32 to vector<8x384xf32>
    %59 = arith.addf %57, %58 : vector<8x384xf32>
    %60 = vector.extract_strided_slice %59 {offsets = [0, 0], sizes = [8, 128], strides = [1, 1]} : vector<8x384xf32> to vector<8x128xf32>
    %61 = vector.extract_strided_slice %59 {offsets = [0, 128], sizes = [8, 128], strides = [1, 1]} : vector<8x384xf32> to vector<8x128xf32>
    %62 = vector.extract_strided_slice %59 {offsets = [0, 256], sizes = [8, 128], strides = [1, 1]} : vector<8x384xf32> to vector<8x128xf32>
    %63 = vector.extract_strided_slice %51 {offsets = [0, 384], sizes = [8, 128], strides = [1, 1]} : vector<8x512xf32> to vector<8x128xf32>
    %64 = math.tanh %63 : vector<8x128xf32>
    %65 = arith.mulf %61, %43 : vector<8x128xf32>
    %66 = arith.mulf %60, %64 : vector<8x128xf32>
    %67 = arith.addf %65, %66 : vector<8x128xf32>
    %68 = math.tanh %67 : vector<8x128xf32>
    %69 = arith.mulf %62, %68 : vector<8x128xf32>
    %cst_32 = arith.constant 0.285714298 : f32
    %70 = vector.broadcast %cst_32 : f32 to vector<8x512xf32>
    %71 = arith.mulf %70, %19 : vector<8x512xf32>
    %72 = arith.addf %16, %71 : vector<8x512xf32>
    %c0_33 = arith.constant 0 : index
    %c0_34 = arith.constant 0 : index
    %73 = vector.load %arg6[%c0_33, %c0_34] : memref<128x512xf32, #tpu.memory_space<vmem>>, vector<128x512xf32>
    %cst_35 = arith.constant dense<0.000000e+00> : vector<8x512xf32>
    %74 = tpu.matmul %69, %73, %cst_35 {dimension_numbers = #tpu.dot_dimension_numbers<[1], [0], [0], [1], [0, 0, 1, 1], [], []>} : vector<8x128xf32>, vector<128x512xf32>, vector<8x512xf32> -> vector<8x512xf32>
    %75 = arith.addf %72, %74 : vector<8x512xf32>
    %76 = vector.extract_strided_slice %75 {offsets = [0, 0], sizes = [8, 384], strides = [1, 1]} : vector<8x512xf32> to vector<8x384xf32>
    %cst_36 = arith.constant 5.000000e-01 : f32
    %77 = vector.broadcast %cst_36 : f32 to vector<8x384xf32>
    %78 = arith.mulf %77, %76 : vector<8x384xf32>
    %79 = math.tanh %78 : vector<8x384xf32>
    %cst_37 = arith.constant 5.000000e-01 : f32
    %80 = vector.broadcast %cst_37 : f32 to vector<8x384xf32>
    %81 = arith.mulf %80, %79 : vector<8x384xf32>
    %cst_38 = arith.constant 5.000000e-01 : f32
    %82 = vector.broadcast %cst_38 : f32 to vector<8x384xf32>
    %83 = arith.addf %81, %82 : vector<8x384xf32>
    %84 = vector.extract_strided_slice %83 {offsets = [0, 0], sizes = [8, 128], strides = [1, 1]} : vector<8x384xf32> to vector<8x128xf32>
    %85 = vector.extract_strided_slice %83 {offsets = [0, 128], sizes = [8, 128], strides = [1, 1]} : vector<8x384xf32> to vector<8x128xf32>
    %86 = vector.extract_strided_slice %83 {offsets = [0, 256], sizes = [8, 128], strides = [1, 1]} : vector<8x384xf32> to vector<8x128xf32>
    %87 = vector.extract_strided_slice %75 {offsets = [0, 384], sizes = [8, 128], strides = [1, 1]} : vector<8x512xf32> to vector<8x128xf32>
    %88 = math.tanh %87 : vector<8x128xf32>
    %89 = arith.mulf %85, %67 : vector<8x128xf32>
    %90 = arith.mulf %84, %88 : vector<8x128xf32>
    %91 = arith.addf %89, %90 : vector<8x128xf32>
    %92 = math.tanh %91 : vector<8x128xf32>
    %93 = arith.mulf %86, %92 : vector<8x128xf32>
    %cst_39 = arith.constant 0.428571433 : f32
    %94 = vector.broadcast %cst_39 : f32 to vector<8x512xf32>
    %95 = arith.mulf %94, %19 : vector<8x512xf32>
    %96 = arith.addf %16, %95 : vector<8x512xf32>
    %c0_40 = arith.constant 0 : index
    %c0_41 = arith.constant 0 : index
    %97 = vector.load %arg6[%c0_40, %c0_41] : memref<128x512xf32, #tpu.memory_space<vmem>>, vector<128x512xf32>
    %cst_42 = arith.constant dense<0.000000e+00> : vector<8x512xf32>
    %98 = tpu.matmul %93, %97, %cst_42 {dimension_numbers = #tpu.dot_dimension_numbers<[1], [0], [0], [1], [0, 0, 1, 1], [], []>} : vector<8x128xf32>, vector<128x512xf32>, vector<8x512xf32> -> vector<8x512xf32>
    %99 = arith.addf %96, %98 : vector<8x512xf32>
    %100 = vector.extract_strided_slice %99 {offsets = [0, 0], sizes = [8, 384], strides = [1, 1]} : vector<8x512xf32> to vector<8x384xf32>
    %cst_43 = arith.constant 5.000000e-01 : f32
    %101 = vector.broadcast %cst_43 : f32 to vector<8x384xf32>
    %102 = arith.mulf %101, %100 : vector<8x384xf32>
    %103 = math.tanh %102 : vector<8x384xf32>
    %cst_44 = arith.constant 5.000000e-01 : f32
    %104 = vector.broadcast %cst_44 : f32 to vector<8x384xf32>
    %105 = arith.mulf %104, %103 : vector<8x384xf32>
    %cst_45 = arith.constant 5.000000e-01 : f32
    %106 = vector.broadcast %cst_45 : f32 to vector<8x384xf32>
    %107 = arith.addf %105, %106 : vector<8x384xf32>
    %108 = vector.extract_strided_slice %107 {offsets = [0, 0], sizes = [8, 128], strides = [1, 1]} : vector<8x384xf32> to vector<8x128xf32>
    %109 = vector.extract_strided_slice %107 {offsets = [0, 128], sizes = [8, 128], strides = [1, 1]} : vector<8x384xf32> to vector<8x128xf32>
    %110 = vector.extract_strided_slice %107 {offsets = [0, 256], sizes = [8, 128], strides = [1, 1]} : vector<8x384xf32> to vector<8x128xf32>
    %111 = vector.extract_strided_slice %99 {offsets = [0, 384], sizes = [8, 128], strides = [1, 1]} : vector<8x512xf32> to vector<8x128xf32>
    %112 = math.tanh %111 : vector<8x128xf32>
    %113 = arith.mulf %109, %91 : vector<8x128xf32>
    %114 = arith.mulf %108, %112 : vector<8x128xf32>
    %115 = arith.addf %113, %114 : vector<8x128xf32>
    %116 = math.tanh %115 : vector<8x128xf32>
    %117 = arith.mulf %110, %116 : vector<8x128xf32>
    %cst_46 = arith.constant 0.571428597 : f32
    %118 = vector.broadcast %cst_46 : f32 to vector<8x512xf32>
    %119 = arith.mulf %118, %19 : vector<8x512xf32>
    %120 = arith.addf %16, %119 : vector<8x512xf32>
    %c0_47 = arith.constant 0 : index
    %c0_48 = arith.constant 0 : index
    %121 = vector.load %arg6[%c0_47, %c0_48] : memref<128x512xf32, #tpu.memory_space<vmem>>, vector<128x512xf32>
    %cst_49 = arith.constant dense<0.000000e+00> : vector<8x512xf32>
    %122 = tpu.matmul %117, %121, %cst_49 {dimension_numbers = #tpu.dot_dimension_numbers<[1], [0], [0], [1], [0, 0, 1, 1], [], []>} : vector<8x128xf32>, vector<128x512xf32>, vector<8x512xf32> -> vector<8x512xf32>
    %123 = arith.addf %120, %122 : vector<8x512xf32>
    %124 = vector.extract_strided_slice %123 {offsets = [0, 0], sizes = [8, 384], strides = [1, 1]} : vector<8x512xf32> to vector<8x384xf32>
    %cst_50 = arith.constant 5.000000e-01 : f32
    %125 = vector.broadcast %cst_50 : f32 to vector<8x384xf32>
    %126 = arith.mulf %125, %124 : vector<8x384xf32>
    %127 = math.tanh %126 : vector<8x384xf32>
    %cst_51 = arith.constant 5.000000e-01 : f32
    %128 = vector.broadcast %cst_51 : f32 to vector<8x384xf32>
    %129 = arith.mulf %128, %127 : vector<8x384xf32>
    %cst_52 = arith.constant 5.000000e-01 : f32
    %130 = vector.broadcast %cst_52 : f32 to vector<8x384xf32>
    %131 = arith.addf %129, %130 : vector<8x384xf32>
    %132 = vector.extract_strided_slice %131 {offsets = [0, 0], sizes = [8, 128], strides = [1, 1]} : vector<8x384xf32> to vector<8x128xf32>
    %133 = vector.extract_strided_slice %131 {offsets = [0, 128], sizes = [8, 128], strides = [1, 1]} : vector<8x384xf32> to vector<8x128xf32>
    %134 = vector.extract_strided_slice %131 {offsets = [0, 256], sizes = [8, 128], strides = [1, 1]} : vector<8x384xf32> to vector<8x128xf32>
    %135 = vector.extract_strided_slice %123 {offsets = [0, 384], sizes = [8, 128], strides = [1, 1]} : vector<8x512xf32> to vector<8x128xf32>
    %136 = math.tanh %135 : vector<8x128xf32>
    %137 = arith.mulf %133, %115 : vector<8x128xf32>
    %138 = arith.mulf %132, %136 : vector<8x128xf32>
    %139 = arith.addf %137, %138 : vector<8x128xf32>
    %140 = math.tanh %139 : vector<8x128xf32>
    %141 = arith.mulf %134, %140 : vector<8x128xf32>
    %cst_53 = arith.constant 0.714285731 : f32
    %142 = vector.broadcast %cst_53 : f32 to vector<8x512xf32>
    %143 = arith.mulf %142, %19 : vector<8x512xf32>
    %144 = arith.addf %16, %143 : vector<8x512xf32>
    %c0_54 = arith.constant 0 : index
    %c0_55 = arith.constant 0 : index
    %145 = vector.load %arg6[%c0_54, %c0_55] : memref<128x512xf32, #tpu.memory_space<vmem>>, vector<128x512xf32>
    %cst_56 = arith.constant dense<0.000000e+00> : vector<8x512xf32>
    %146 = tpu.matmul %141, %145, %cst_56 {dimension_numbers = #tpu.dot_dimension_numbers<[1], [0], [0], [1], [0, 0, 1, 1], [], []>} : vector<8x128xf32>, vector<128x512xf32>, vector<8x512xf32> -> vector<8x512xf32>
    %147 = arith.addf %144, %146 : vector<8x512xf32>
    %148 = vector.extract_strided_slice %147 {offsets = [0, 0], sizes = [8, 384], strides = [1, 1]} : vector<8x512xf32> to vector<8x384xf32>
    %cst_57 = arith.constant 5.000000e-01 : f32
    %149 = vector.broadcast %cst_57 : f32 to vector<8x384xf32>
    %150 = arith.mulf %149, %148 : vector<8x384xf32>
    %151 = math.tanh %150 : vector<8x384xf32>
    %cst_58 = arith.constant 5.000000e-01 : f32
    %152 = vector.broadcast %cst_58 : f32 to vector<8x384xf32>
    %153 = arith.mulf %152, %151 : vector<8x384xf32>
    %cst_59 = arith.constant 5.000000e-01 : f32
    %154 = vector.broadcast %cst_59 : f32 to vector<8x384xf32>
    %155 = arith.addf %153, %154 : vector<8x384xf32>
    %156 = vector.extract_strided_slice %155 {offsets = [0, 0], sizes = [8, 128], strides = [1, 1]} : vector<8x384xf32> to vector<8x128xf32>
    %157 = vector.extract_strided_slice %155 {offsets = [0, 128], sizes = [8, 128], strides = [1, 1]} : vector<8x384xf32> to vector<8x128xf32>
    %158 = vector.extract_strided_slice %155 {offsets = [0, 256], sizes = [8, 128], strides = [1, 1]} : vector<8x384xf32> to vector<8x128xf32>
    %159 = vector.extract_strided_slice %147 {offsets = [0, 384], sizes = [8, 128], strides = [1, 1]} : vector<8x512xf32> to vector<8x128xf32>
    %160 = math.tanh %159 : vector<8x128xf32>
    %161 = arith.mulf %157, %139 : vector<8x128xf32>
    %162 = arith.mulf %156, %160 : vector<8x128xf32>
    %163 = arith.addf %161, %162 : vector<8x128xf32>
    %164 = math.tanh %163 : vector<8x128xf32>
    %165 = arith.mulf %158, %164 : vector<8x128xf32>
    %cst_60 = arith.constant 0.857142865 : f32
    %166 = vector.broadcast %cst_60 : f32 to vector<8x512xf32>
    %167 = arith.mulf %166, %19 : vector<8x512xf32>
    %168 = arith.addf %16, %167 : vector<8x512xf32>
    %c0_61 = arith.constant 0 : index
    %c0_62 = arith.constant 0 : index
    %169 = vector.load %arg6[%c0_61, %c0_62] : memref<128x512xf32, #tpu.memory_space<vmem>>, vector<128x512xf32>
    %cst_63 = arith.constant dense<0.000000e+00> : vector<8x512xf32>
    %170 = tpu.matmul %165, %169, %cst_63 {dimension_numbers = #tpu.dot_dimension_numbers<[1], [0], [0], [1], [0, 0, 1, 1], [], []>} : vector<8x128xf32>, vector<128x512xf32>, vector<8x512xf32> -> vector<8x512xf32>
    %171 = arith.addf %168, %170 : vector<8x512xf32>
    %172 = vector.extract_strided_slice %171 {offsets = [0, 0], sizes = [8, 384], strides = [1, 1]} : vector<8x512xf32> to vector<8x384xf32>
    %cst_64 = arith.constant 5.000000e-01 : f32
    %173 = vector.broadcast %cst_64 : f32 to vector<8x384xf32>
    %174 = arith.mulf %173, %172 : vector<8x384xf32>
    %175 = math.tanh %174 : vector<8x384xf32>
    %cst_65 = arith.constant 5.000000e-01 : f32
    %176 = vector.broadcast %cst_65 : f32 to vector<8x384xf32>
    %177 = arith.mulf %176, %175 : vector<8x384xf32>
    %cst_66 = arith.constant 5.000000e-01 : f32
    %178 = vector.broadcast %cst_66 : f32 to vector<8x384xf32>
    %179 = arith.addf %177, %178 : vector<8x384xf32>
    %180 = vector.extract_strided_slice %179 {offsets = [0, 0], sizes = [8, 128], strides = [1, 1]} : vector<8x384xf32> to vector<8x128xf32>
    %181 = vector.extract_strided_slice %179 {offsets = [0, 128], sizes = [8, 128], strides = [1, 1]} : vector<8x384xf32> to vector<8x128xf32>
    %182 = vector.extract_strided_slice %179 {offsets = [0, 256], sizes = [8, 128], strides = [1, 1]} : vector<8x384xf32> to vector<8x128xf32>
    %183 = vector.extract_strided_slice %171 {offsets = [0, 384], sizes = [8, 128], strides = [1, 1]} : vector<8x512xf32> to vector<8x128xf32>
    %184 = math.tanh %183 : vector<8x128xf32>
    %185 = arith.mulf %181, %163 : vector<8x128xf32>
    %186 = arith.mulf %180, %184 : vector<8x128xf32>
    %187 = arith.addf %185, %186 : vector<8x128xf32>
    %188 = math.tanh %187 : vector<8x128xf32>
    %189 = arith.mulf %182, %188 : vector<8x128xf32>
    %cst_67 = arith.constant 1.000000e+00 : f32
    %190 = vector.broadcast %cst_67 : f32 to vector<8x512xf32>
    %191 = arith.mulf %190, %19 : vector<8x512xf32>
    %192 = arith.addf %16, %191 : vector<8x512xf32>
    %c0_68 = arith.constant 0 : index
    %c0_69 = arith.constant 0 : index
    %193 = vector.load %arg6[%c0_68, %c0_69] : memref<128x512xf32, #tpu.memory_space<vmem>>, vector<128x512xf32>
    %cst_70 = arith.constant dense<0.000000e+00> : vector<8x512xf32>
    %194 = tpu.matmul %189, %193, %cst_70 {dimension_numbers = #tpu.dot_dimension_numbers<[1], [0], [0], [1], [0, 0, 1, 1], [], []>} : vector<8x128xf32>, vector<128x512xf32>, vector<8x512xf32> -> vector<8x512xf32>
    %195 = arith.addf %192, %194 : vector<8x512xf32>
    %196 = vector.extract_strided_slice %195 {offsets = [0, 0], sizes = [8, 384], strides = [1, 1]} : vector<8x512xf32> to vector<8x384xf32>
    %cst_71 = arith.constant 5.000000e-01 : f32
    %197 = vector.broadcast %cst_71 : f32 to vector<8x384xf32>
    %198 = arith.mulf %197, %196 : vector<8x384xf32>
    %199 = math.tanh %198 : vector<8x384xf32>
    %cst_72 = arith.constant 5.000000e-01 : f32
    %200 = vector.broadcast %cst_72 : f32 to vector<8x384xf32>
    %201 = arith.mulf %200, %199 : vector<8x384xf32>
    %cst_73 = arith.constant 5.000000e-01 : f32
    %202 = vector.broadcast %cst_73 : f32 to vector<8x384xf32>
    %203 = arith.addf %201, %202 : vector<8x384xf32>
    %204 = vector.extract_strided_slice %203 {offsets = [0, 0], sizes = [8, 128], strides = [1, 1]} : vector<8x384xf32> to vector<8x128xf32>
    %205 = vector.extract_strided_slice %203 {offsets = [0, 128], sizes = [8, 128], strides = [1, 1]} : vector<8x384xf32> to vector<8x128xf32>
    %206 = vector.extract_strided_slice %203 {offsets = [0, 256], sizes = [8, 128], strides = [1, 1]} : vector<8x384xf32> to vector<8x128xf32>
    %207 = vector.extract_strided_slice %195 {offsets = [0, 384], sizes = [8, 128], strides = [1, 1]} : vector<8x512xf32> to vector<8x128xf32>
    %208 = math.tanh %207 : vector<8x128xf32>
    %209 = arith.mulf %205, %187 : vector<8x128xf32>
    %210 = arith.mulf %204, %208 : vector<8x128xf32>
    %211 = arith.addf %209, %210 : vector<8x128xf32>
    %212 = math.tanh %211 : vector<8x128xf32>
    %213 = arith.mulf %206, %212 : vector<8x128xf32>
    %214 = tpu.concatenate %45, %69, %93, %117, %141, %165, %189, %213 in 0 : vector<8x128xf32>, vector<8x128xf32>, vector<8x128xf32>, vector<8x128xf32>, vector<8x128xf32>, vector<8x128xf32>, vector<8x128xf32>, vector<8x128xf32> -> vector<64x128xf32>
    %c0_74 = arith.constant 0 : index
    %c0_75 = arith.constant 0 : index
    %215 = vector.load %arg7[%c0_74, %c0_75] : memref<128x256xf32, #tpu.memory_space<vmem>>, vector<128x256xf32>
    %cst_76 = arith.constant dense<0.000000e+00> : vector<64x256xf32>
    %216 = tpu.matmul %214, %215, %cst_76 {dimension_numbers = #tpu.dot_dimension_numbers<[1], [0], [0], [1], [0, 0, 1, 1], [], []>} : vector<64x128xf32>, vector<128x256xf32>, vector<64x256xf32> -> vector<64x256xf32>
    %c0_77 = arith.constant 0 : index
    %c0_78 = arith.constant 0 : index
    %217 = vector.load %arg8[%c0_77, %c0_78] : memref<1x256xf32, #tpu.memory_space<vmem>>, vector<1x256xf32>
    %218 = vector.broadcast %217 : vector<1x256xf32> to vector<64x256xf32>
    %219 = arith.addf %216, %218 : vector<64x256xf32>
    %cst_79 = arith.constant 5.000000e-01 : f32
    %220 = vector.broadcast %cst_79 : f32 to vector<64x256xf32>
    %221 = arith.mulf %220, %219 : vector<64x256xf32>
    %222 = math.tanh %221 : vector<64x256xf32>
    %cst_80 = arith.constant 5.000000e-01 : f32
    %223 = vector.broadcast %cst_80 : f32 to vector<64x256xf32>
    %224 = arith.mulf %223, %222 : vector<64x256xf32>
    %cst_81 = arith.constant 5.000000e-01 : f32
    %225 = vector.broadcast %cst_81 : f32 to vector<64x256xf32>
    %226 = arith.addf %224, %225 : vector<64x256xf32>
    %c0_82 = arith.constant 0 : index
    %c0_83 = arith.constant 0 : index
    %227 = vector.load %arg9[%c0_82, %c0_83] : memref<64x256xf32, #tpu.memory_space<vmem>>, vector<64x256xf32>
    tpu.vector_store %arg9[%c0_82, %c0_83], %226 {strides = array<i32>} : memref<64x256xf32, #tpu.memory_space<vmem>>, vector<64x256xf32>,
    return
  }
}

</mosaic_0001>

<llo_original>
// kernel: encoder_decoder_forward.1
$region0: #{encoder_decoder_forward.1}
  #allocation0 [shape = 'u32[]', space=smem, size = 0x4, offset = 0x4, fixed_abs, tag = 'smem constant byte address 0x4 - core index']
  #allocation1 [shape = 'u32[144,128]{1,0:T(1,128)}', space=vmem, size = 0x12000, scoped, tag = 'internal scratch']
  %s0 = inlined_call_operand.vmem [shape: f32[8,4], index: 0, kind: input, shape index: {}]
  %s1 = inlined_call_operand.vmem [shape: f32[4,64], index: 1, kind: input, shape index: {}]
  %s2 = inlined_call_operand.vmem [shape: f32[64,64], index: 2, kind: input, shape index: {}]
  %s3 = inlined_call_operand.vmem [shape: f32[1,64], index: 3, kind: input, shape index: {}]
  %s4 = inlined_call_operand.vmem [shape: f32[64,512], index: 4, kind: input, shape index: {}]
  %s5 = inlined_call_operand.vmem [shape: f32[2,512], index: 5, kind: input, shape index: {}]
  %s6 = inlined_call_operand.vmem [shape: f32[128,512], index: 6, kind: input, shape index: {}]
  %s7 = inlined_call_operand.vmem [shape: f32[128,256], index: 7, kind: input, shape index: {}]
  %s8 = inlined_call_operand.vmem [shape: f32[1,256], index: 8, kind: input, shape index: {}]
  %s9 = inlined_call_operand.vmem [shape: f32[64,256], index: 9, kind: output, shape index: {}]
  %s10 = sld [smem:[#allocation0]]
  $region46: #{encoder_decoder_forward.1} parent=0
    _
  %s12 = ssub.s32 1, %s10
  %s13 = scalar_select 0, %s12, %s10
  // Predicated region
  $region2: #{encoder_decoder_forward.1} parent=0 // pred_check
    _
  $region3: #{encoder_decoder_forward.1} parent=0 // pred_check_branch
    %15 = sbr.rel (0) target = $region5
  $region4: #{encoder_decoder_forward.1} parent=0 // pred_region
    _
  $region5: #{encoder_decoder_forward.1} parent=0 // pred_fallthru
    _
  // Predicated region
  $region6: #{encoder_decoder_forward.1} parent=0 // pred_check
    _
  $region7: #{encoder_decoder_forward.1} parent=0 // pred_check_branch
    %17 = sbr.rel (0) target = $region9
  $region8: #{encoder_decoder_forward.1} parent=0 // pred_region
    _
  $region9: #{encoder_decoder_forward.1} parent=0 // pred_fallthru
    _
  // Predicated region
  $region10: #{encoder_decoder_forward.1} parent=0 // pred_check
    _
  $region11: #{encoder_decoder_forward.1} parent=0 // pred_check_branch
    %19 = sbr.rel (0) target = $region13
  $region12: #{encoder_decoder_forward.1} parent=0 // pred_region
    _
  $region13: #{encoder_decoder_forward.1} parent=0 // pred_fallthru
    _
  // Predicated region
  $region14: #{encoder_decoder_forward.1} parent=0 // pred_check
    _
  $region15: #{encoder_decoder_forward.1} parent=0 // pred_check_branch
    %21 = sbr.rel (0) target = $region17
  $region16: #{encoder_decoder_forward.1} parent=0 // pred_region
    _
  $region17: #{encoder_decoder_forward.1} parent=0 // pred_fallthru
    _
  // Predicated region
  $region18: #{encoder_decoder_forward.1} parent=0 // pred_check
    _
  $region19: #{encoder_decoder_forward.1} parent=0 // pred_check_branch
    %23 = sbr.rel (0) target = $region21
  $region20: #{encoder_decoder_forward.1} parent=0 // pred_region
    _
  $region21: #{encoder_decoder_forward.1} parent=0 // pred_fallthru
    _
  // Predicated region
  $region22: #{encoder_decoder_forward.1} parent=0 // pred_check
    _
  $region23: #{encoder_decoder_forward.1} parent=0 // pred_check_branch
    %25 = sbr.rel (0) target = $region25
  $region24: #{encoder_decoder_forward.1} parent=0 // pred_region
    _
  $region25: #{encoder_decoder_forward.1} parent=0 // pred_fallthru
    _
  // Predicated region
  $region26: #{encoder_decoder_forward.1} parent=0 // pred_check
    _
  $region27: #{encoder_decoder_forward.1} parent=0 // pred_check_branch
    %27 = sbr.rel (0) target = $region29
  $region28: #{encoder_decoder_forward.1} parent=0 // pred_region
    _
  $region29: #{encoder_decoder_forward.1} parent=0 // pred_fallthru
    _
  // Predicated region
  $region30: #{encoder_decoder_forward.1} parent=0 // pred_check
    _
  $region31: #{encoder_decoder_forward.1} parent=0 // pred_check_branch
    %29 = sbr.rel (0) target = $region33
  $region32: #{encoder_decoder_forward.1} parent=0 // pred_region
    _
  $region33: #{encoder_decoder_forward.1} parent=0 // pred_fallthru
    _
  // Predicated region
  $region34: #{encoder_decoder_forward.1} parent=0 // pred_check
    _
  $region35: #{encoder_decoder_forward.1} parent=0 // pred_check_branch
    %31 = sbr.rel (0) target = $region37
  $region36: #{encoder_decoder_forward.1} parent=0 // pred_region
    _
  $region37: #{encoder_decoder_forward.1} parent=0 // pred_fallthru
    _
  %v32 = vld [vmem:[%s0] sm:$0xff]
  %v33 = vld [vmem:[%s1] sm:$0xf]
  %vm34 = vcmask 31744
  %v36 = vsel %vm34, %v32, 0
  %vm38 = vcmask 1043456
  %v40 = vsel %vm38, %v33, 0
  %42 = vmatprep.subr.mxu0 0.0
  %43 = vmatpush1.msra.mxu0 %v40
  %44 = vmatprep.subr.mxu0 0.0
  %45 = vmatpush1.msra.mxu0 0.0
  %46 = vmatprep.subr.mxu0 0.0
  %47 = vmatpush1.msra.mxu0 0.0
  %48 = vmatprep.subr.mxu0 0.0
  %49 = vmatpush1.msra.mxu0 0.0
  %50 = vmatprep.subr.mxu0 0.0
  %51 = vmatpush1.msra.mxu0 0.0
  %52 = vmatprep.subr.mxu0 0.0
  %53 = vmatpush1.msra.mxu0 0.0
  %54 = vmatprep.subr.mxu0 0.0
  %55 = vmatpush1.msra.mxu0 0.0
  %56 = vmatprep.subr.mxu0 0.0
  %57 = vmatpush1.msra.mxu0 0.0
  %58 = vmatprep.subr.mxu0 0.0
  %59 = vmatpush1.msra.mxu0 0.0
  %60 = vmatprep.subr.mxu0 0.0
  %61 = vmatpush1.msra.mxu0 0.0
  %62 = vmatprep.subr.mxu0 0.0
  %63 = vmatpush1.msra.mxu0 0.0
  %64 = vmatprep.subr.mxu0 0.0
  %65 = vmatpush1.msra.mxu0 0.0
  %66 = vmatprep.subr.mxu0 0.0
  %67 = vmatpush1.msra.mxu0 0.0
  %68 = vmatprep.subr.mxu0 0.0
  %69 = vmatpush1.msra.mxu0 0.0
  %70 = vmatprep.subr.mxu0 0.0
  %71 = vmatpush1.msra.mxu0 0.0
  %72 = vmatprep.subr.mxu0 0.0
  %73 = vmatpush1.msra.mxu0 0.0
  %74 = vmatprep.subr.mxu0 0.0
  %75 = vmatpush1.msra.mxu0 0.0
  %76 = vmatprep.subr.mxu0 0.0
  %77 = vmatpush1.msra.mxu0 0.0
  %78 = vmatprep.subr.mxu0 0.0
  %79 = vmatpush1.msra.mxu0 0.0
  %80 = vmatprep.subr.mxu0 0.0
  %81 = vmatpush1.msra.mxu0 0.0
  %82 = vmatprep.subr.mxu0 0.0
  %83 = vmatpush1.msra.mxu0 0.0
  %84 = vmatprep.subr.mxu0 0.0
  %85 = vmatpush1.msra.mxu0 0.0
  %86 = vmatprep.subr.mxu0 0.0
  %87 = vmatpush1.msra.mxu0 0.0
  %88 = vmatprep.subr.mxu0 0.0
  %89 = vmatpush1.msra.mxu0 0.0
  %90 = vmatprep.subr.mxu0 0.0
  %91 = vmatpush1.msra.mxu0 0.0
  %92 = vmatprep.subr.mxu0 0.0
  %93 = vmatpush1.msra.mxu0 0.0
  %94 = vmatprep.subr.mxu0 0.0
  %95 = vmatpush1.msra.mxu0 0.0
  %96 = vmatprep.subr.mxu0 0.0
  %97 = vmatpush1.msra.mxu0 0.0
  %98 = vmatprep.subr.mxu0 0.0
  %99 = vmatpush1.msra.mxu0 0.0
  %100 = vmatprep.subr.mxu0 0.0
  %101 = vmatpush1.msra.mxu0 0.0
  %102 = vmatprep.subr.mxu0 0.0
  %103 = vmatpush1.msra.mxu0 0.0
  %104 = vmatprep.subr.mxu0 0.0
  %105 = vmatpush1.msra.mxu0 0.0
  %106 = vmatprep.mubr.f32.mxu0 0.0
  %107 = vmatmul.mubr.f32.gmra.mrb[0].mxu0 %v36
  %v108 = vpop.f32.mrb[0].mxu0
  %v109 = vadd.f32 0.0, %v108
  %v110 = vpop.f32.mrb[0].mxu0
  %111 = vdwg.mxu0
  %v112 = vmax.f32 %v109, 0.0
  %v113 = vld [vmem:[%s2] sm:$0xff]
  %v114 = vld [vmem:[%s2 + $0x8] sm:$0xff]
  %v115 = vld [vmem:[%s2 + $0x10] sm:$0xff]
  %v116 = vld [vmem:[%s2 + $0x18] sm:$0xff]
  %v117 = vld [vmem:[%s2 + $0x20] sm:$0xff]
  %v118 = vld [vmem:[%s2 + $0x28] sm:$0xff]
  %v119 = vld [vmem:[%s2 + $0x30] sm:$0xff]
  %v120 = vld [vmem:[%s2 + $0x38] sm:$0xff]
  %v121 = vld [vmem:[%s3] sm:$0x1]
  %v123 = vlaneseq
  %v124 = vshrl.u32 %v123, 7
  %v125 = vsub.s32 0, %v124
  %v126 = vrot.slane %v121, %v125
  %vm128 = vcmask 523264
  %v130 = vsel %vm128, %v112, 0
  %132 = vmatprep.subr.mxu0 0.0
  %133 = vmatpush1.msra.mxu0 %v113
  %134 = vmatprep.subr.mxu0 0.0
  %135 = vmatpush1.msra.mxu0 %v114
  %136 = vmatprep.subr.mxu0 0.0
  %137 = vmatpush1.msra.mxu0 %v115
  %138 = vmatprep.subr.mxu0 0.0
  %139 = vmatpush1.msra.mxu0 %v116
  %140 = vmatprep.subr.mxu0 0.0
  %141 = vmatpush1.msra.mxu0 %v117
  %142 = vmatprep.subr.mxu0 0.0
  %143 = vmatpush1.msra.mxu0 %v118
  %144 = vmatprep.subr.mxu0 0.0
  %145 = vmatpush1.msra.mxu0 %v119
  %146 = vmatprep.subr.mxu0 0.0
  %147 = vmatpush1.msra.mxu0 %v120
  %148 = vmatprep.subr.mxu0 0.0
  %149 = vmatpush1.msra.mxu0 0.0
  %150 = vmatprep.subr.mxu0 0.0
  %151 = vmatpush1.msra.mxu0 0.0
  %152 = vmatprep.subr.mxu0 0.0
  %153 = vmatpush1.msra.mxu0 0.0
  %154 = vmatprep.subr.mxu0 0.0
  %155 = vmatpush1.msra.mxu0 0.0
  %156 = vmatprep.subr.mxu0 0.0
  %157 = vmatpush1.msra.mxu0 0.0
  %158 = vmatprep.subr.mxu0 0.0
  %159 = vmatpush1.msra.mxu0 0.0
  %160 = vmatprep.subr.mxu0 0.0
  %161 = vmatpush1.msra.mxu0 0.0
  %162 = vmatprep.subr.mxu0 0.0
  %163 = vmatpush1.msra.mxu0 0.0
  %164 = vmatprep.subr.mxu0 0.0
  %165 = vmatpush1.msra.mxu0 0.0
  %166 = vmatprep.subr.mxu0 0.0
  %167 = vmatpush1.msra.mxu0 0.0
  %168 = vmatprep.subr.mxu0 0.0
  %169 = vmatpush1.msra.mxu0 0.0
  %170 = vmatprep.subr.mxu0 0.0
  %171 = vmatpush1.msra.mxu0 0.0
  %172 = vmatprep.subr.mxu0 0.0
  %173 = vmatpush1.msra.mxu0 0.0
  %174 = vmatprep.subr.mxu0 0.0
  %175 = vmatpush1.msra.mxu0 0.0
  %176 = vmatprep.subr.mxu0 0.0
  %177 = vmatpush1.msra.mxu0 0.0
  %178 = vmatprep.subr.mxu0 0.0
  %179 = vmatpush1.msra.mxu0 0.0
  %180 = vmatprep.subr.mxu0 0.0
  %181 = vmatpush1.msra.mxu0 0.0
  %182 = vmatprep.subr.mxu0 0.0
  %183 = vmatpush1.msra.mxu0 0.0
  %184 = vmatprep.subr.mxu0 0.0
  %185 = vmatpush1.msra.mxu0 0.0
  %186 = vmatprep.subr.mxu0 0.0
  %187 = vmatpush1.msra.mxu0 0.0
  %188 = vmatprep.subr.mxu0 0.0
  %189 = vmatpush1.msra.mxu0 0.0
  %190 = vmatprep.subr.mxu0 0.0
  %191 = vmatpush1.msra.mxu0 0.0
  %192 = vmatprep.subr.mxu0 0.0
  %193 = vmatpush1.msra.mxu0 0.0
  %194 = vmatprep.subr.mxu0 0.0
  %195 = vmatpush1.msra.mxu0 0.0
  %196 = vmatprep.mubr.f32.mxu0 0.0
  %197 = vmatmul.mubr.f32.gmra.mrb[0].mxu0 %v130
  %v198 = vpop.f32.mrb[0].mxu0
  %v199 = vadd.f32 %v126, %v198
  %v200 = vpop.f32.mrb[0].mxu0
  %201 = vdwg.mxu0
  %v202 = vmax.f32 %v199, 0.0
  %v203 = vld [vmem:[%s4] sm:$0xff]
  %v204 = vld [vmem:[%s4 + $0x8] sm:$0xff]
  %v205 = vld [vmem:[%s4 + $0x10] sm:$0xff]
  %v206 = vld [vmem:[%s4 + $0x18] sm:$0xff]
  %v207 = vld [vmem:[%s4 + $0x20] sm:$0xff]
  %v208 = vld [vmem:[%s4 + $0x28] sm:$0xff]
  %v209 = vld [vmem:[%s4 + $0x30] sm:$0xff]
  %v210 = vld [vmem:[%s4 + $0x38] sm:$0xff]
  %v211 = vld [vmem:[%s4 + $0x40] sm:$0xff]
  %v212 = vld [vmem:[%s4 + $0x48] sm:$0xff]
  %v213 = vld [vmem:[%s4 + $0x50] sm:$0xff]
  %v214 = vld [vmem:[%s4 + $0x58] sm:$0xff]
  %v215 = vld [vmem:[%s4 + $0x60] sm:$0xff]
  %v216 = vld [vmem:[%s4 + $0x68] sm:$0xff]
  %v217 = vld [vmem:[%s4 + $0x70] sm:$0xff]
  %v218 = vld [vmem:[%s4 + $0x78] sm:$0xff]
  %v219 = vld [vmem:[%s4 + $0x80] sm:$0xff]
  %v220 = vld [vmem:[%s4 + $0x88] sm:$0xff]
  %v221 = vld [vmem:[%s4 + $0x90] sm:$0xff]
  %v222 = vld [vmem:[%s4 + $0x98] sm:$0xff]
  %v223 = vld [vmem:[%s4 + $0xa0] sm:$0xff]
  %v224 = vld [vmem:[%s4 + $0xa8] sm:$0xff]
  %v225 = vld [vmem:[%s4 + $0xb0] sm:$0xff]
  %v226 = vld [vmem:[%s4 + $0xb8] sm:$0xff]
  %v227 = vld [vmem:[%s4 + $0xc0] sm:$0xff]
  %v228 = vld [vmem:[%s4 + $0xc8] sm:$0xff]
  %v229 = vld [vmem:[%s4 + $0xd0] sm:$0xff]
  %v230 = vld [vmem:[%s4 + $0xd8] sm:$0xff]
  %v231 = vld [vmem:[%s4 + $0xe0] sm:$0xff]
  %v232 = vld [vmem:[%s4 + $0xe8] sm:$0xff]
  %v233 = vld [vmem:[%s4 + $0xf0] sm:$0xff]
  %v234 = vld [vmem:[%s4 + $0xf8] sm:$0xff]
  %v235 = vld [vmem:[%s5] ss:$2 sm:$0xf]
  %v237 = vlaneseq
  %v238 = vshrl.u32 %v237, 7
  %v239 = vsub.s32 0, %v238
  %v240 = vrot.slane %v235, %v239
  %v241 = vlaneseq
  %v242 = vshrl.u32 %v241, 7
  %v243 = vsub.s32 1, %v242
  %v244 = vrot.slane %v235, %v243
  %v245 = vlaneseq
  %v246 = vshrl.u32 %v245, 7
  %v247 = vsub.s32 2, %v246
  %v248 = vrot.slane %v235, %v247
  %v249 = vlaneseq
  %v250 = vshrl.u32 %v249, 7
  %v251 = vsub.s32 3, %v250
  %v252 = vrot.slane %v235, %v251
  %v258 = vsel %vm128, %v202, 0
  %260 = vmatprep.subr.mxu0 %v204
  %261 = vmatpush1.msra.mxu0 %v203
  %262 = vmatprep.subr.mxu0 %v208
  %263 = vmatpush1.msra.mxu0 %v207
  %264 = vmatprep.subr.mxu0 %v212
  %265 = vmatpush1.msra.mxu0 %v211
  %266 = vmatprep.subr.mxu0 %v216
  %267 = vmatpush1.msra.mxu0 %v215
  %268 = vmatprep.subr.mxu0 %v220
  %269 = vmatpush1.msra.mxu0 %v219
  %270 = vmatprep.subr.mxu0 %v224
  %271 = vmatpush1.msra.mxu0 %v223
  %272 = vmatprep.subr.mxu0 %v228
  %273 = vmatpush1.msra.mxu0 %v227
  %274 = vmatprep.subr.mxu0 %v232
  %275 = vmatpush1.msra.mxu0 %v231
  %276 = vmatprep.subr.mxu0 0.0
  %277 = vmatpush1.msra.mxu0 0.0
  %278 = vmatprep.subr.mxu0 0.0
  %279 = vmatpush1.msra.mxu0 0.0
  %280 = vmatprep.subr.mxu0 0.0
  %281 = vmatpush1.msra.mxu0 0.0
  %282 = vmatprep.subr.mxu0 0.0
  %283 = vmatpush1.msra.mxu0 0.0
  %284 = vmatprep.subr.mxu0 0.0
  %285 = vmatpush1.msra.mxu0 0.0
  %286 = vmatprep.subr.mxu0 0.0
  %287 = vmatpush1.msra.mxu0 0.0
  %288 = vmatprep.subr.mxu0 0.0
  %289 = vmatpush1.msra.mxu0 0.0
  %290 = vmatprep.subr.mxu0 0.0
  %291 = vmatpush1.msra.mxu0 0.0
  %292 = vmatprep.subr.mxu0 0.0
  %293 = vmatpush1.msra.mxu0 0.0
  %294 = vmatprep.subr.mxu0 0.0
  %295 = vmatpush1.msra.mxu0 0.0
  %296 = vmatprep.subr.mxu0 0.0
  %297 = vmatpush1.msra.mxu0 0.0
  %298 = vmatprep.subr.mxu0 0.0
  %299 = vmatpush1.msra.mxu0 0.0
  %300 = vmatprep.subr.mxu0 0.0
  %301 = vmatpush1.msra.mxu0 0.0
  %302 = vmatprep.subr.mxu0 0.0
  %303 = vmatpush1.msra.mxu0 0.0
  %304 = vmatprep.subr.mxu0 0.0
  %305 = vmatpush1.msra.mxu0 0.0
  %306 = vmatprep.subr.mxu0 0.0
  %307 = vmatpush1.msra.mxu0 0.0
  %308 = vmatprep.subr.mxu0 0.0
  %309 = vmatpush1.msra.mxu0 0.0
  %310 = vmatprep.subr.mxu0 0.0
  %311 = vmatpush1.msra.mxu0 0.0
  %312 = vmatprep.subr.mxu0 0.0
  %313 = vmatpush1.msra.mxu0 0.0
  %314 = vmatprep.subr.mxu0 0.0
  %315 = vmatpush1.msra.mxu0 0.0
  %316 = vmatprep.subr.mxu0 0.0
  %317 = vmatpush1.msra.mxu0 0.0
  %318 = vmatprep.subr.mxu0 0.0
  %319 = vmatpush1.msra.mxu0 0.0
  %320 = vmatprep.subr.mxu0 0.0
  %321 = vmatpush1.msra.mxu0 0.0
  %322 = vmatprep.subr.mxu0 0.0
  %323 = vmatpush1.msra.mxu0 0.0
  %324 = vmatprep.mubr.f32.mxu0 0.0
  %325 = vmatmul.mubr.f32.gmra.mrb[0].mxu0 %v258
  %v326 = vpop.f32.mrb[0].mxu0
  %v327 = vadd.f32 %v240, %v326
  %v328 = vpop.f32.mrb[0].mxu0
  %v329 = vadd.f32 %v244, %v328
  %330 = vdwg.mxu0
  %331 = vmatprep.subr.mxu0 %v206
  %332 = vmatpush1.msra.mxu0 %v205
  %333 = vmatprep.subr.mxu0 %v210
  %334 = vmatpush1.msra.mxu0 %v209
  %335 = vmatprep.subr.mxu0 %v214
  %336 = vmatpush1.msra.mxu0 %v213
  %337 = vmatprep.subr.mxu0 %v218
  %338 = vmatpush1.msra.mxu0 %v217
  %339 = vmatprep.subr.mxu0 %v222
  %340 = vmatpush1.msra.mxu0 %v221
  %341 = vmatprep.subr.mxu0 %v226
  %342 = vmatpush1.msra.mxu0 %v225
  %343 = vmatprep.subr.mxu0 %v230
  %344 = vmatpush1.msra.mxu0 %v229
  %345 = vmatprep.subr.mxu0 %v234
  %346 = vmatpush1.msra.mxu0 %v233
  %347 = vmatprep.subr.mxu0 0.0
  %348 = vmatpush1.msra.mxu0 0.0
  %349 = vmatprep.subr.mxu0 0.0
  %350 = vmatpush1.msra.mxu0 0.0
  %351 = vmatprep.subr.mxu0 0.0
  %352 = vmatpush1.msra.mxu0 0.0
  %353 = vmatprep.subr.mxu0 0.0
  %354 = vmatpush1.msra.mxu0 0.0
  %355 = vmatprep.subr.mxu0 0.0
  %356 = vmatpush1.msra.mxu0 0.0
  %357 = vmatprep.subr.mxu0 0.0
  %358 = vmatpush1.msra.mxu0 0.0
  %359 = vmatprep.subr.mxu0 0.0
  %360 = vmatpush1.msra.mxu0 0.0
  %361 = vmatprep.subr.mxu0 0.0
  %362 = vmatpush1.msra.mxu0 0.0
  %363 = vmatprep.subr.mxu0 0.0
  %364 = vmatpush1.msra.mxu0 0.0
  %365 = vmatprep.subr.mxu0 0.0
  %366 = vmatpush1.msra.mxu0 0.0
  %367 = vmatprep.subr.mxu0 0.0
  %368 = vmatpush1.msra.mxu0 0.0
  %369 = vmatprep.subr.mxu0 0.0
  %370 = vmatpush1.msra.mxu0 0.0
  %371 = vmatprep.subr.mxu0 0.0
  %372 = vmatpush1.msra.mxu0 0.0
  %373 = vmatprep.subr.mxu0 0.0
  %374 = vmatpush1.msra.mxu0 0.0
  %375 = vmatprep.subr.mxu0 0.0
  %376 = vmatpush1.msra.mxu0 0.0
  %377 = vmatprep.subr.mxu0 0.0
  %378 = vmatpush1.msra.mxu0 0.0
  %379 = vmatprep.subr.mxu0 0.0
  %380 = vmatpush1.msra.mxu0 0.0
  %381 = vmatprep.subr.mxu0 0.0
  %382 = vmatpush1.msra.mxu0 0.0
  %383 = vmatprep.subr.mxu0 0.0
  %384 = vmatpush1.msra.mxu0 0.0
  %385 = vmatprep.subr.mxu0 0.0
  %386 = vmatpush1.msra.mxu0 0.0
  %387 = vmatprep.subr.mxu0 0.0
  %388 = vmatpush1.msra.mxu0 0.0
  %389 = vmatprep.subr.mxu0 0.0
  %390 = vmatpush1.msra.mxu0 0.0
  %391 = vmatprep.subr.mxu0 0.0
  %392 = vmatpush1.msra.mxu0 0.0
  %393 = vmatprep.subr.mxu0 0.0
  %394 = vmatpush1.msra.mxu0 0.0
  %395 = vmatprep.mubr.f32.mxu0 0.0
  %396 = vmatmul.mubr.f32.gmra.mrb[0].mxu0 %v258
  %v397 = vpop.f32.mrb[0].mxu0
  %v398 = vadd.f32 %v248, %v397
  %v399 = vpop.f32.mrb[0].mxu0
  %v400 = vadd.f32 %v252, %v399
  %401 = vdwg.mxu0
  %s402 = scalar_lea.vmem %s5, 1
  %v403 = vld [vmem:[%s402] ss:$2 sm:$0xf]
  %v405 = vlaneseq
  %v406 = vshrl.u32 %v405, 7
  %v407 = vsub.s32 0, %v406
  %v408 = vrot.slane %v403, %v407
  %v409 = vlaneseq
  %v410 = vshrl.u32 %v409, 7
  %v411 = vsub.s32 1, %v410
  %v412 = vrot.slane %v403, %v411
  %v413 = vlaneseq
  %v414 = vshrl.u32 %v413, 7
  %v415 = vsub.s32 2, %v414
  %v416 = vrot.slane %v403, %v415
  %v417 = vlaneseq
  %v418 = vshrl.u32 %v417, 7
  %v419 = vsub.s32 3, %v418
  %v420 = vrot.slane %v403, %v419
  %v425 = vmul.f32 %v408, 0.0
  %v426 = vmul.f32 %v412, 0.0
  %v427 = vmul.f32 %v416, 0.0
  %v428 = vmul.f32 %v420, 0.0
  %v429 = vadd.f32 %v327, %v425
  %v430 = vadd.f32 %v329, %v426
  %v431 = vadd.f32 %v398, %v427
  %v432 = vadd.f32 %v400, %v428
  %v433 = vld [vmem:[%s6] sm:$0xff]
  %v434 = vld [vmem:[%s6 + $0x8] sm:$0xff]
  %v435 = vld [vmem:[%s6 + $0x10] sm:$0xff]
  %v436 = vld [vmem:[%s6 + $0x18] sm:$0xff]
  %v437 = vld [vmem:[%s6 + $0x20] sm:$0xff]
  %v438 = vld [vmem:[%s6 + $0x28] sm:$0xff]
  %v439 = vld [vmem:[%s6 + $0x30] sm:$0xff]
  %v440 = vld [vmem:[%s6 + $0x38] sm:$0xff]
  %v441 = vld [vmem:[%s6 + $0x40] sm:$0xff]
  %v442 = vld [vmem:[%s6 + $0x48] sm:$0xff]
  %v443 = vld [vmem:[%s6 + $0x50] sm:$0xff]
  %v444 = vld [vmem:[%s6 + $0x58] sm:$0xff]
  %v445 = vld [vmem:[%s6 + $0x60] sm:$0xff]
  %v446 = vld [vmem:[%s6 + $0x68] sm:$0xff]
  %v447 = vld [vmem:[%s6 + $0x70] sm:$0xff]
  %v448 = vld [vmem:[%s6 + $0x78] sm:$0xff]
  %v449 = vld [vmem:[%s6 + $0x80] sm:$0xff]
  %v450 = vld [vmem:[%s6 + $0x88] sm:$0xff]
  %v451 = vld [vmem:[%s6 + $0x90] sm:$0xff]
  %v452 = vld [vmem:[%s6 + $0x98] sm:$0xff]
  %v453 = vld [vmem:[%s6 + $0xa0] sm:$0xff]
  %v454 = vld [vmem:[%s6 + $0xa8] sm:$0xff]
  %v455 = vld [vmem:[%s6 + $0xb0] sm:$0xff]
  %v456 = vld [vmem:[%s6 + $0xb8] sm:$0xff]
  %v457 = vld [vmem:[%s6 + $0xc0] sm:$0xff]
  %v458 = vld [vmem:[%s6 + $0xc8] sm:$0xff]
  %v459 = vld [vmem:[%s6 + $0xd0] sm:$0xff]
  %v460 = vld [vmem:[%s6 + $0xd8] sm:$0xff]
  %v461 = vld [vmem:[%s6 + $0xe0] sm:$0xff]
  %v462 = vld [vmem:[%s6 + $0xe8] sm:$0xff]
  %v463 = vld [vmem:[%s6 + $0xf0] sm:$0xff]
  %v464 = vld [vmem:[%s6 + $0xf8] sm:$0xff]
  %v465 = vld [vmem:[%s6 + $0x100] sm:$0xff]
  %v466 = vld [vmem:[%s6 + $0x108] sm:$0xff]
  %v467 = vld [vmem:[%s6 + $0x110] sm:$0xff]
  %v468 = vld [vmem:[%s6 + $0x118] sm:$0xff]
  %v469 = vld [vmem:[%s6 + $0x120] sm:$0xff]
  %v470 = vld [vmem:[%s6 + $0x128] sm:$0xff]
  %v471 = vld [vmem:[%s6 + $0x130] sm:$0xff]
  %v472 = vld [vmem:[%s6 + $0x138] sm:$0xff]
  %v473 = vld [vmem:[%s6 + $0x140] sm:$0xff]
  %v474 = vld [vmem:[%s6 + $0x148] sm:$0xff]
  %v475 = vld [vmem:[%s6 + $0x150] sm:$0xff]
  %v476 = vld [vmem:[%s6 + $0x158] sm:$0xff]
  %v477 = vld [vmem:[%s6 + $0x160] sm:$0xff]
  %v478 = vld [vmem:[%s6 + $0x168] sm:$0xff]
  %v479 = vld [vmem:[%s6 + $0x170] sm:$0xff]
  %v480 = vld [vmem:[%s6 + $0x178] sm:$0xff]
  %v481 = vld [vmem:[%s6 + $0x180] sm:$0xff]
  %v482 = vld [vmem:[%s6 + $0x188] sm:$0xff]
  %v483 = vld [vmem:[%s6 + $0x190] sm:$0xff]
  %v484 = vld [vmem:[%s6 + $0x198] sm:$0xff]
  %v485 = vld [vmem:[%s6 + $0x1a0] sm:$0xff]
  %v486 = vld [vmem:[%s6 + $0x1a8] sm:$0xff]
  %v487 = vld [vmem:[%s6 + $0x1b0] sm:$0xff]
  %v488 = vld [vmem:[%s6 + $0x1b8] sm:$0xff]
  %v489 = vld [vmem:[%s6 + $0x1c0] sm:$0xff]
  %v490 = vld [vmem:[%s6 + $0x1c8] sm:$0xff]
  %v491 = vld [vmem:[%s6 + $0x1d0] sm:$0xff]
  %v492 = vld [vmem:[%s6 + $0x1d8] sm:$0xff]
  %v493 = vld [vmem:[%s6 + $0x1e0] sm:$0xff]
  %v494 = vld [vmem:[%s6 + $0x1e8] sm:$0xff]
  %v495 = vld [vmem:[%s6 + $0x1f0] sm:$0xff]
  %v496 = vld [vmem:[%s6 + $0x1f8] sm:$0xff]
  %497 = vmatprep.subr.mxu0 %v434
  %498 = vmatpush1.msra.mxu0 %v433
  %499 = vmatprep.subr.mxu0 %v438
  %500 = vmatpush1.msra.mxu0 %v437
  %501 = vmatprep.subr.mxu0 %v442
  %502 = vmatpush1.msra.mxu0 %v441
  %503 = vmatprep.subr.mxu0 %v446
  %504 = vmatpush1.msra.mxu0 %v445
  %505 = vmatprep.subr.mxu0 %v450
  %506 = vmatpush1.msra.mxu0 %v449
  %507 = vmatprep.subr.mxu0 %v454
  %508 = vmatpush1.msra.mxu0 %v453
  %509 = vmatprep.subr.mxu0 %v458
  %510 = vmatpush1.msra.mxu0 %v457
  %511 = vmatprep.subr.mxu0 %v462
  %512 = vmatpush1.msra.mxu0 %v461
  %513 = vmatprep.subr.mxu0 %v466
  %514 = vmatpush1.msra.mxu0 %v465
  %515 = vmatprep.subr.mxu0 %v470
  %516 = vmatpush1.msra.mxu0 %v469
  %517 = vmatprep.subr.mxu0 %v474
  %518 = vmatpush1.msra.mxu0 %v473
  %519 = vmatprep.subr.mxu0 %v478
  %520 = vmatpush1.msra.mxu0 %v477
  %521 = vmatprep.subr.mxu0 %v482
  %522 = vmatpush1.msra.mxu0 %v481
  %523 = vmatprep.subr.mxu0 %v486
  %524 = vmatpush1.msra.mxu0 %v485
  %525 = vmatprep.subr.mxu0 %v490
  %526 = vmatpush1.msra.mxu0 %v489
  %527 = vmatprep.subr.mxu0 %v494
  %528 = vmatpush1.msra.mxu0 %v493
  %529 = vmatprep.subr.mxu0 0.0
  %530 = vmatpush1.msra.mxu0 0.0
  %531 = vmatprep.subr.mxu0 0.0
  %532 = vmatpush1.msra.mxu0 0.0
  %533 = vmatprep.subr.mxu0 0.0
  %534 = vmatpush1.msra.mxu0 0.0
  %535 = vmatprep.subr.mxu0 0.0
  %536 = vmatpush1.msra.mxu0 0.0
  %537 = vmatprep.subr.mxu0 0.0
  %538 = vmatpush1.msra.mxu0 0.0
  %539 = vmatprep.subr.mxu0 0.0
  %540 = vmatpush1.msra.mxu0 0.0
  %541 = vmatprep.subr.mxu0 0.0
  %542 = vmatpush1.msra.mxu0 0.0
  %543 = vmatprep.subr.mxu0 0.0
  %544 = vmatpush1.msra.mxu0 0.0
  %545 = vmatprep.subr.mxu0 0.0
  %546 = vmatpush1.msra.mxu0 0.0
  %547 = vmatprep.subr.mxu0 0.0
  %548 = vmatpush1.msra.mxu0 0.0
  %549 = vmatprep.subr.mxu0 0.0
  %550 = vmatpush1.msra.mxu0 0.0
  %551 = vmatprep.subr.mxu0 0.0
  %552 = vmatpush1.msra.mxu0 0.0
  %553 = vmatprep.subr.mxu0 0.0
  %554 = vmatpush1.msra.mxu0 0.0
  %555 = vmatprep.subr.mxu0 0.0
  %556 = vmatpush1.msra.mxu0 0.0
  %557 = vmatprep.subr.mxu0 0.0
  %558 = vmatpush1.msra.mxu0 0.0
  %559 = vmatprep.subr.mxu0 0.0
  %560 = vmatpush1.msra.mxu0 0.0
  %561 = vmatprep.mubr.f32.mxu0 0.0
  %562 = vmatmul.mubr.f32.gmra.mrb[0].mxu0 0.0
  %v563 = vpop.f32.mrb[0].mxu0
  %v564 = vadd.f32 0.0, %v563
  %v565 = vpop.f32.mrb[0].mxu0
  %v566 = vadd.f32 0.0, %v565
  %567 = vdwg.mxu0
  %568 = vmatprep.subr.mxu0 %v436
  %569 = vmatpush1.msra.mxu0 %v435
  %570 = vmatprep.subr.mxu0 %v440
  %571 = vmatpush1.msra.mxu0 %v439
  %572 = vmatprep.subr.mxu0 %v444
  %573 = vmatpush1.msra.mxu0 %v443
  %574 = vmatprep.subr.mxu0 %v448
  %575 = vmatpush1.msra.mxu0 %v447
  %576 = vmatprep.subr.mxu0 %v452
  %577 = vmatpush1.msra.mxu0 %v451
  %578 = vmatprep.subr.mxu0 %v456
  %579 = vmatpush1.msra.mxu0 %v455
  %580 = vmatprep.subr.mxu0 %v460
  %581 = vmatpush1.msra.mxu0 %v459
  %582 = vmatprep.subr.mxu0 %v464
  %583 = vmatpush1.msra.mxu0 %v463
  %584 = vmatprep.subr.mxu0 %v468
  %585 = vmatpush1.msra.mxu0 %v467
  %586 = vmatprep.subr.mxu0 %v472
  %587 = vmatpush1.msra.mxu0 %v471
  %588 = vmatprep.subr.mxu0 %v476
  %589 = vmatpush1.msra.mxu0 %v475
  %590 = vmatprep.subr.mxu0 %v480
  %591 = vmatpush1.msra.mxu0 %v479
  %592 = vmatprep.subr.mxu0 %v484
  %593 = vmatpush1.msra.mxu0 %v483
  %594 = vmatprep.subr.mxu0 %v488
  %595 = vmatpush1.msra.mxu0 %v487
  %596 = vmatprep.subr.mxu0 %v492
  %597 = vmatpush1.msra.mxu0 %v491
  %598 = vmatprep.subr.mxu0 %v496
  %599 = vmatpush1.msra.mxu0 %v495
  %600 = vmatprep.subr.mxu0 0.0
  %601 = vmatpush1.msra.mxu0 0.0
  %602 = vmatprep.subr.mxu0 0.0
  %603 = vmatpush1.msra.mxu0 0.0
  %604 = vmatprep.subr.mxu0 0.0
  %605 = vmatpush1.msra.mxu0 0.0
  %606 = vmatprep.subr.mxu0 0.0
  %607 = vmatpush1.msra.mxu0 0.0
  %608 = vmatprep.subr.mxu0 0.0
  %609 = vmatpush1.msra.mxu0 0.0
  %610 = vmatprep.subr.mxu0 0.0
  %611 = vmatpush1.msra.mxu0 0.0
  %612 = vmatprep.subr.mxu0 0.0
  %613 = vmatpush1.msra.mxu0 0.0
  %614 = vmatprep.subr.mxu0 0.0
  %615 = vmatpush1.msra.mxu0 0.0
  %616 = vmatprep.subr.mxu0 0.0
  %617 = vmatpush1.msra.mxu0 0.0
  %618 = vmatprep.subr.mxu0 0.0
  %619 = vmatpush1.msra.mxu0 0.0
  %620 = vmatprep.subr.mxu0 0.0
  %621 = vmatpush1.msra.mxu0 0.0
  %622 = vmatprep.subr.mxu0 0.0
  %623 = vmatpush1.msra.mxu0 0.0
  %624 = vmatprep.subr.mxu0 0.0
  %625 = vmatpush1.msra.mxu0 0.0
  %626 = vmatprep.subr.mxu0 0.0
  %627 = vmatpush1.msra.mxu0 0.0
  %628 = vmatprep.subr.mxu0 0.0
  %629 = vmatpush1.msra.mxu0 0.0
  %630 = vmatprep.subr.mxu0 0.0
  %631 = vmatpush1.msra.mxu0 0.0
  %632 = vmatprep.mubr.f32.mxu0 0.0
  %633 = vmatmul.mubr.f32.gmra.mrb[0].mxu0 0.0
  %v634 = vpop.f32.mrb[0].mxu0
  %v635 = vadd.f32 0.0, %v634
  %v636 = vpop.f32.mrb[0].mxu0
  %v637 = vadd.f32 0.0, %v636
  %638 = vdwg.mxu0
  %v639 = vadd.f32 %v429, %v564
  %v640 = vadd.f32 %v430, %v566
  %v641 = vadd.f32 %v431, %v635
  %v642 = vadd.f32 %v432, %v637
  %v643 = vmul.f32 %v639, 0.5
  %v644 = vmul.f32 %v640, 0.5
  %v645 = vmul.f32 %v641, 0.5
  %v646 = vtanh.pop %v643
  %v647 = vtanh.pop %v644
  %v648 = vtanh.pop %v645
  %v649 = vmul.f32 %v646, 0.5
  %v650 = vmul.f32 %v647, 0.5
  %v651 = vmul.f32 %v648, 0.5
  %v652 = vadd.f32 %v649, 0.5
  %v653 = vadd.f32 %v650, 0.5
  %v654 = vadd.f32 %v651, 0.5
  %v655 = vtanh.pop %v642
  %v656 = vmul.f32 %v653, 0.0
  %v657 = vmul.f32 %v652, %v655
  %v658 = vadd.f32 %v656, %v657
  %v659 = vtanh.pop %v658
  %v660 = vmul.f32 %v654, %v659
  %v661 = vmul.f32 %v408, 0.14285715
  %v662 = vmul.f32 %v412, 0.14285715
  %v663 = vmul.f32 %v416, 0.14285715
  %v664 = vmul.f32 %v420, 0.14285715
  %v665 = vadd.f32 %v327, %v661
  %v666 = vadd.f32 %v329, %v662
  %v667 = vadd.f32 %v398, %v663
  %v668 = vadd.f32 %v400, %v664
  %669 = vmatprep.subr.mxu0 %v434
  %670 = vmatpush1.msra.mxu0 %v433
  %671 = vmatprep.subr.mxu0 %v438
  %672 = vmatpush1.msra.mxu0 %v437
  %673 = vmatprep.subr.mxu0 %v442
  %674 = vmatpush1.msra.mxu0 %v441
  %675 = vmatprep.subr.mxu0 %v446
  %676 = vmatpush1.msra.mxu0 %v445
  %677 = vmatprep.subr.mxu0 %v450
  %678 = vmatpush1.msra.mxu0 %v449
  %679 = vmatprep.subr.mxu0 %v454
  %680 = vmatpush1.msra.mxu0 %v453
  %681 = vmatprep.subr.mxu0 %v458
  %682 = vmatpush1.msra.mxu0 %v457
  %683 = vmatprep.subr.mxu0 %v462
  %684 = vmatpush1.msra.mxu0 %v461
  %685 = vmatprep.subr.mxu0 %v466
  %686 = vmatpush1.msra.mxu0 %v465
  %687 = vmatprep.subr.mxu0 %v470
  %688 = vmatpush1.msra.mxu0 %v469
  %689 = vmatprep.subr.mxu0 %v474
  %690 = vmatpush1.msra.mxu0 %v473
  %691 = vmatprep.subr.mxu0 %v478
  %692 = vmatpush1.msra.mxu0 %v477
  %693 = vmatprep.subr.mxu0 %v482
  %694 = vmatpush1.msra.mxu0 %v481
  %695 = vmatprep.subr.mxu0 %v486
  %696 = vmatpush1.msra.mxu0 %v485
  %697 = vmatprep.subr.mxu0 %v490
  %698 = vmatpush1.msra.mxu0 %v489
  %699 = vmatprep.subr.mxu0 %v494
  %700 = vmatpush1.msra.mxu0 %v493
  %701 = vmatprep.subr.mxu0 0.0
  %702 = vmatpush1.msra.mxu0 0.0
  %703 = vmatprep.subr.mxu0 0.0
  %704 = vmatpush1.msra.mxu0 0.0
  %705 = vmatprep.subr.mxu0 0.0
  %706 = vmatpush1.msra.mxu0 0.0
  %707 = vmatprep.subr.mxu0 0.0
  %708 = vmatpush1.msra.mxu0 0.0
  %709 = vmatprep.subr.mxu0 0.0
  %710 = vmatpush1.msra.mxu0 0.0
  %711 = vmatprep.subr.mxu0 0.0
  %712 = vmatpush1.msra.mxu0 0.0
  %713 = vmatprep.subr.mxu0 0.0
  %714 = vmatpush1.msra.mxu0 0.0
  %715 = vmatprep.subr.mxu0 0.0
  %716 = vmatpush1.msra.mxu0 0.0
  %717 = vmatprep.subr.mxu0 0.0
  %718 = vmatpush1.msra.mxu0 0.0
  %719 = vmatprep.subr.mxu0 0.0
  %720 = vmatpush1.msra.mxu0 0.0
  %721 = vmatprep.subr.mxu0 0.0
  %722 = vmatpush1.msra.mxu0 0.0
  %723 = vmatprep.subr.mxu0 0.0
  %724 = vmatpush1.msra.mxu0 0.0
  %725 = vmatprep.subr.mxu0 0.0
  %726 = vmatpush1.msra.mxu0 0.0
  %727 = vmatprep.subr.mxu0 0.0
  %728 = vmatpush1.msra.mxu0 0.0
  %729 = vmatprep.subr.mxu0 0.0
  %730 = vmatpush1.msra.mxu0 0.0
  %731 = vmatprep.subr.mxu0 0.0
  %732 = vmatpush1.msra.mxu0 0.0
  %733 = vmatprep.mubr.f32.mxu0 0.0
  %734 = vmatmul.mubr.f32.gmra.mrb[0].mxu0 %v660
  %v735 = vpop.f32.mrb[0].mxu0
  %v736 = vadd.f32 0.0, %v735
  %v737 = vpop.f32.mrb[0].mxu0
  %v738 = vadd.f32 0.0, %v737
  %739 = vdwg.mxu0
  %740 = vmatprep.subr.mxu0 %v436
  %741 = vmatpush1.msra.mxu0 %v435
  %742 = vmatprep.subr.mxu0 %v440
  %743 = vmatpush1.msra.mxu0 %v439
  %744 = vmatprep.subr.mxu0 %v444
  %745 = vmatpush1.msra.mxu0 %v443
  %746 = vmatprep.subr.mxu0 %v448
  %747 = vmatpush1.msra.mxu0 %v447
  %748 = vmatprep.subr.mxu0 %v452
  %749 = vmatpush1.msra.mxu0 %v451
  %750 = vmatprep.subr.mxu0 %v456
  %751 = vmatpush1.msra.mxu0 %v455
  %752 = vmatprep.subr.mxu0 %v460
  %753 = vmatpush1.msra.mxu0 %v459
  %754 = vmatprep.subr.mxu0 %v464
  %755 = vmatpush1.msra.mxu0 %v463
  %756 = vmatprep.subr.mxu0 %v468
  %757 = vmatpush1.msra.mxu0 %v467
  %758 = vmatprep.subr.mxu0 %v472
  %759 = vmatpush1.msra.mxu0 %v471
  %760 = vmatprep.subr.mxu0 %v476
  %761 = vmatpush1.msra.mxu0 %v475
  %762 = vmatprep.subr.mxu0 %v480
  %763 = vmatpush1.msra.mxu0 %v479
  %764 = vmatprep.subr.mxu0 %v484
  %765 = vmatpush1.msra.mxu0 %v483
  %766 = vmatprep.subr.mxu0 %v488
  %767 = vmatpush1.msra.mxu0 %v487
  %768 = vmatprep.subr.mxu0 %v492
  %769 = vmatpush1.msra.mxu0 %v491
  %770 = vmatprep.subr.mxu0 %v496
  %771 = vmatpush1.msra.mxu0 %v495
  %772 = vmatprep.subr.mxu0 0.0
  %773 = vmatpush1.msra.mxu0 0.0
  %774 = vmatprep.subr.mxu0 0.0
  %775 = vmatpush1.msra.mxu0 0.0
  %776 = vmatprep.subr.mxu0 0.0
  %777 = vmatpush1.msra.mxu0 0.0
  %778 = vmatprep.subr.mxu0 0.0
  %779 = vmatpush1.msra.mxu0 0.0
  %780 = vmatprep.subr.mxu0 0.0
  %781 = vmatpush1.msra.mxu0 0.0
  %782 = vmatprep.subr.mxu0 0.0
  %783 = vmatpush1.msra.mxu0 0.0
  %784 = vmatprep.subr.mxu0 0.0
  %785 = vmatpush1.msra.mxu0 0.0
  %786 = vmatprep.subr.mxu0 0.0
  %787 = vmatpush1.msra.mxu0 0.0
  %788 = vmatprep.subr.mxu0 0.0
  %789 = vmatpush1.msra.mxu0 0.0
  %790 = vmatprep.subr.mxu0 0.0
  %791 = vmatpush1.msra.mxu0 0.0
  %792 = vmatprep.subr.mxu0 0.0
  %793 = vmatpush1.msra.mxu0 0.0
  %794 = vmatprep.subr.mxu0 0.0
  %795 = vmatpush1.msra.mxu0 0.0
  %796 = vmatprep.subr.mxu0 0.0
  %797 = vmatpush1.msra.mxu0 0.0
  %798 = vmatprep.subr.mxu0 0.0
  %799 = vmatpush1.msra.mxu0 0.0
  %800 = vmatprep.subr.mxu0 0.0
  %801 = vmatpush1.msra.mxu0 0.0
  %802 = vmatprep.subr.mxu0 0.0
  %803 = vmatpush1.msra.mxu0 0.0
  %804 = vmatprep.mubr.f32.mxu0 0.0
  %805 = vmatmul.mubr.f32.gmra.mrb[0].mxu0 %v660
  %v806 = vpop.f32.mrb[0].mxu0
  %v807 = vadd.f32 0.0, %v806
  %v808 = vpop.f32.mrb[0].mxu0
  %v809 = vadd.f32 0.0, %v808
  %810 = vdwg.mxu0
  %v811 = vadd.f32 %v665, %v736
  %v812 = vadd.f32 %v666, %v738
  %v813 = vadd.f32 %v667, %v807
  %v814 = vadd.f32 %v668, %v809
  %v815 = vmul.f32 %v811, 0.5
  %v816 = vmul.f32 %v812, 0.5
  %v817 = vmul.f32 %v813, 0.5
  %v818 = vtanh.pop %v815
  %v819 = vtanh.pop %v816
  %v820 = vtanh.pop %v817
  %v821 = vmul.f32 %v818, 0.5
  %v822 = vmul.f32 %v819, 0.5
  %v823 = vmul.f32 %v820, 0.5
  %v824 = vadd.f32 %v821, 0.5
  %v825 = vadd.f32 %v822, 0.5
  %v826 = vadd.f32 %v823, 0.5
  %v827 = vtanh.pop %v814
  %v828 = vmul.f32 %v825, %v658
  %v829 = vmul.f32 %v824, %v827
  %v830 = vadd.f32 %v828, %v829
  %v831 = vtanh.pop %v830
  %v832 = vmul.f32 %v826, %v831
  %v833 = vmul.f32 %v408, 0.2857143
  %v834 = vmul.f32 %v412, 0.2857143
  %v835 = vmul.f32 %v416, 0.2857143
  %v836 = vmul.f32 %v420, 0.2857143
  %v837 = vadd.f32 %v327, %v833
  %v838 = vadd.f32 %v329, %v834
  %v839 = vadd.f32 %v398, %v835
  %v840 = vadd.f32 %v400, %v836
  %841 = vmatprep.subr.mxu0 %v434
  %842 = vmatpush1.msra.mxu0 %v433
  %843 = vmatprep.subr.mxu0 %v438
  %844 = vmatpush1.msra.mxu0 %v437
  %845 = vmatprep.subr.mxu0 %v442
  %846 = vmatpush1.msra.mxu0 %v441
  %847 = vmatprep.subr.mxu0 %v446
  %848 = vmatpush1.msra.mxu0 %v445
  %849 = vmatprep.subr.mxu0 %v450
  %850 = vmatpush1.msra.mxu0 %v449
  %851 = vmatprep.subr.mxu0 %v454
  %852 = vmatpush1.msra.mxu0 %v453
  %853 = vmatprep.subr.mxu0 %v458
  %854 = vmatpush1.msra.mxu0 %v457
  %855 = vmatprep.subr.mxu0 %v462
  %856 = vmatpush1.msra.mxu0 %v461
  %857 = vmatprep.subr.mxu0 %v466
  %858 = vmatpush1.msra.mxu0 %v465
  %859 = vmatprep.subr.mxu0 %v470
  %860 = vmatpush1.msra.mxu0 %v469
  %861 = vmatprep.subr.mxu0 %v474
  %862 = vmatpush1.msra.mxu0 %v473
  %863 = vmatprep.subr.mxu0 %v478
  %864 = vmatpush1.msra.mxu0 %v477
  %865 = vmatprep.subr.mxu0 %v482
  %866 = vmatpush1.msra.mxu0 %v481
  %867 = vmatprep.subr.mxu0 %v486
  %868 = vmatpush1.msra.mxu0 %v485
  %869 = vmatprep.subr.mxu0 %v490
  %870 = vmatpush1.msra.mxu0 %v489
  %871 = vmatprep.subr.mxu0 %v494
  %872 = vmatpush1.msra.mxu0 %v493
  %873 = vmatprep.subr.mxu0 0.0
  %874 = vmatpush1.msra.mxu0 0.0
  %875 = vmatprep.subr.mxu0 0.0
  %876 = vmatpush1.msra.mxu0 0.0
  %877 = vmatprep.subr.mxu0 0.0
  %878 = vmatpush1.msra.mxu0 0.0
  %879 = vmatprep.subr.mxu0 0.0
  %880 = vmatpush1.msra.mxu0 0.0
  %881 = vmatprep.subr.mxu0 0.0
  %882 = vmatpush1.msra.mxu0 0.0
  %883 = vmatprep.subr.mxu0 0.0
  %884 = vmatpush1.msra.mxu0 0.0
  %885 = vmatprep.subr.mxu0 0.0
  %886 = vmatpush1.msra.mxu0 0.0
  %887 = vmatprep.subr.mxu0 0.0
  %888 = vmatpush1.msra.mxu0 0.0
  %889 = vmatprep.subr.mxu0 0.0
  %890 = vmatpush1.msra.mxu0 0.0
  %891 = vmatprep.subr.mxu0 0.0
  %892 = vmatpush1.msra.mxu0 0.0
  %893 = vmatprep.subr.mxu0 0.0
  %894 = vmatpush1.msra.mxu0 0.0
  %895 = vmatprep.subr.mxu0 0.0
  %896 = vmatpush1.msra.mxu0 0.0
  %897 = vmatprep.subr.mxu0 0.0
  %898 = vmatpush1.msra.mxu0 0.0
  %899 = vmatprep.subr.mxu0 0.0
  %900 = vmatpush1.msra.mxu0 0.0
  %901 = vmatprep.subr.mxu0 0.0
  %902 = vmatpush1.msra.mxu0 0.0
  %903 = vmatprep.subr.mxu0 0.0
  %904 = vmatpush1.msra.mxu0 0.0
  %905 = vmatprep.mubr.f32.mxu0 0.0
  %906 = vmatmul.mubr.f32.gmra.mrb[0].mxu0 %v832
  %v907 = vpop.f32.mrb[0].mxu0
  %v908 = vadd.f32 0.0, %v907
  %v909 = vpop.f32.mrb[0].mxu0
  %v910 = vadd.f32 0.0, %v909
  %911 = vdwg.mxu0
  %912 = vmatprep.subr.mxu0 %v436
  %913 = vmatpush1.msra.mxu0 %v435
  %914 = vmatprep.subr.mxu0 %v440
  %915 = vmatpush1.msra.mxu0 %v439
  %916 = vmatprep.subr.mxu0 %v444
  %917 = vmatpush1.msra.mxu0 %v443
  %918 = vmatprep.subr.mxu0 %v448
  %919 = vmatpush1.msra.mxu0 %v447
  %920 = vmatprep.subr.mxu0 %v452
  %921 = vmatpush1.msra.mxu0 %v451
  %922 = vmatprep.subr.mxu0 %v456
  %923 = vmatpush1.msra.mxu0 %v455
  %924 = vmatprep.subr.mxu0 %v460
  %925 = vmatpush1.msra.mxu0 %v459
  %926 = vmatprep.subr.mxu0 %v464
  %927 = vmatpush1.msra.mxu0 %v463
  %928 = vmatprep.subr.mxu0 %v468
  %929 = vmatpush1.msra.mxu0 %v467
  %930 = vmatprep.subr.mxu0 %v472
  %931 = vmatpush1.msra.mxu0 %v471
  %932 = vmatprep.subr.mxu0 %v476
  %933 = vmatpush1.msra.mxu0 %v475
  %934 = vmatprep.subr.mxu0 %v480
  %935 = vmatpush1.msra.mxu0 %v479
  %936 = vmatprep.subr.mxu0 %v484
  %937 = vmatpush1.msra.mxu0 %v483
  %938 = vmatprep.subr.mxu0 %v488
  %939 = vmatpush1.msra.mxu0 %v487
  %940 = vmatprep.subr.mxu0 %v492
  %941 = vmatpush1.msra.mxu0 %v491
  %942 = vmatprep.subr.mxu0 %v496
  %943 = vmatpush1.msra.mxu0 %v495
  %944 = vmatprep.subr.mxu0 0.0
  %945 = vmatpush1.msra.mxu0 0.0
  %946 = vmatprep.subr.mxu0 0.0
  %947 = vmatpush1.msra.mxu0 0.0
  %948 = vmatprep.subr.mxu0 0.0
  %949 = vmatpush1.msra.mxu0 0.0
  %950 = vmatprep.subr.mxu0 0.0
  %951 = vmatpush1.msra.mxu0 0.0
  %952 = vmatprep.subr.mxu0 0.0
  %953 = vmatpush1.msra.mxu0 0.0
  %954 = vmatprep.subr.mxu0 0.0
  %955 = vmatpush1.msra.mxu0 0.0
  %956 = vmatprep.subr.mxu0 0.0
  %957 = vmatpush1.msra.mxu0 0.0
  %958 = vmatprep.subr.mxu0 0.0
  %959 = vmatpush1.msra.mxu0 0.0
  %960 = vmatprep.subr.mxu0 0.0
  %961 = vmatpush1.msra.mxu0 0.0
  %962 = vmatprep.subr.mxu0 0.0
  %963 = vmatpush1.msra.mxu0 0.0
  %964 = vmatprep.subr.mxu0 0.0
  %965 = vmatpush1.msra.mxu0 0.0
  %966 = vmatprep.subr.mxu0 0.0
  %967 = vmatpush1.msra.mxu0 0.0
  %968 = vmatprep.subr.mxu0 0.0
  %969 = vmatpush1.msra.mxu0 0.0
  %970 = vmatprep.subr.mxu0 0.0
  %971 = vmatpush1.msra.mxu0 0.0
  %972 = vmatprep.subr.mxu0 0.0
  %973 = vmatpush1.msra.mxu0 0.0
  %974 = vmatprep.subr.mxu0 0.0
  %975 = vmatpush1.msra.mxu0 0.0
  %976 = vmatprep.mubr.f32.mxu0 0.0
  %977 = vmatmul.mubr.f32.gmra.mrb[0].mxu0 %v832
  %v978 = vpop.f32.mrb[0].mxu0
  %v979 = vadd.f32 0.0, %v978
  %v980 = vpop.f32.mrb[0].mxu0
  %v981 = vadd.f32 0.0, %v980
  %982 = vdwg.mxu0
  %v983 = vadd.f32 %v837, %v908
  %v984 = vadd.f32 %v838, %v910
  %v985 = vadd.f32 %v839, %v979
  %v986 = vadd.f32 %v840, %v981
  %v987 = vmul.f32 %v983, 0.5
  %v988 = vmul.f32 %v984, 0.5
  %v989 = vmul.f32 %v985, 0.5
  %v990 = vtanh.pop %v987
  %v991 = vtanh.pop %v988
  %v992 = vtanh.pop %v989
  %v993 = vmul.f32 %v990, 0.5
  %v994 = vmul.f32 %v991, 0.5
  %v995 = vmul.f32 %v992, 0.5
  %v996 = vadd.f32 %v993, 0.5
  %v997 = vadd.f32 %v994, 0.5
  %v998 = vadd.f32 %v995, 0.5
  %v999 = vtanh.pop %v986
  %v1000 = vmul.f32 %v997, %v830
  %v1001 = vmul.f32 %v996, %v999
  %v1002 = vadd.f32 %v1000, %v1001
  %v1003 = vtanh.pop %v1002
  %v1004 = vmul.f32 %v998, %v1003
  %v1005 = vmul.f32 %v408, 0.42857143
  %v1006 = vmul.f32 %v412, 0.42857143
  %v1007 = vmul.f32 %v416, 0.42857143
  %v1008 = vmul.f32 %v420, 0.42857143
  %v1009 = vadd.f32 %v327, %v1005
  %v1010 = vadd.f32 %v329, %v1006
  %v1011 = vadd.f32 %v398, %v1007
  %v1012 = vadd.f32 %v400, %v1008
  %1013 = vmatprep.subr.mxu0 %v434
  %1014 = vmatpush1.msra.mxu0 %v433
  %1015 = vmatprep.subr.mxu0 %v438
  %1016 = vmatpush1.msra.mxu0 %v437
  %1017 = vmatprep.subr.mxu0 %v442
  %1018 = vmatpush1.msra.mxu0 %v441
  %1019 = vmatprep.subr.mxu0 %v446
  %1020 = vmatpush1.msra.mxu0 %v445
  %1021 = vmatprep.subr.mxu0 %v450
  %1022 = vmatpush1.msra.mxu0 %v449
  %1023 = vmatprep.subr.mxu0 %v454
  %1024 = vmatpush1.msra.mxu0 %v453
  %1025 = vmatprep.subr.mxu0 %v458
  %1026 = vmatpush1.msra.mxu0 %v457
  %1027 = vmatprep.subr.mxu0 %v462
  %1028 = vmatpush1.msra.mxu0 %v461
  %1029 = vmatprep.subr.mxu0 %v466
  %1030 = vmatpush1.msra.mxu0 %v465
  %1031 = vmatprep.subr.mxu0 %v470
  %1032 = vmatpush1.msra.mxu0 %v469
  %1033 = vmatprep.subr.mxu0 %v474
  %1034 = vmatpush1.msra.mxu0 %v473
  %1035 = vmatprep.subr.mxu0 %v478
  %1036 = vmatpush1.msra.mxu0 %v477
  %1037 = vmatprep.subr.mxu0 %v482
  %1038 = vmatpush1.msra.mxu0 %v481
  %1039 = vmatprep.subr.mxu0 %v486
  %1040 = vmatpush1.msra.mxu0 %v485
  %1041 = vmatprep.subr.mxu0 %v490
  %1042 = vmatpush1.msra.mxu0 %v489
  %1043 = vmatprep.subr.mxu0 %v494
  %1044 = vmatpush1.msra.mxu0 %v493
  %1045 = vmatprep.subr.mxu0 0.0
  %1046 = vmatpush1.msra.mxu0 0.0
  %1047 = vmatprep.subr.mxu0 0.0
  %1048 = vmatpush1.msra.mxu0 0.0
  %1049 = vmatprep.subr.mxu0 0.0
  %1050 = vmatpush1.msra.mxu0 0.0
  %1051 = vmatprep.subr.mxu0 0.0
  %1052 = vmatpush1.msra.mxu0 0.0
  %1053 = vmatprep.subr.mxu0 0.0
  %1054 = vmatpush1.msra.mxu0 0.0
  %1055 = vmatprep.subr.mxu0 0.0
  %1056 = vmatpush1.msra.mxu0 0.0
  %1057 = vmatprep.subr.mxu0 0.0
  %1058 = vmatpush1.msra.mxu0 0.0
  %1059 = vmatprep.subr.mxu0 0.0
  %1060 = vmatpush1.msra.mxu0 0.0
  %1061 = vmatprep.subr.mxu0 0.0
  %1062 = vmatpush1.msra.mxu0 0.0
  %1063 = vmatprep.subr.mxu0 0.0
  %1064 = vmatpush1.msra.mxu0 0.0
  %1065 = vmatprep.subr.mxu0 0.0
  %1066 = vmatpush1.msra.mxu0 0.0
  %1067 = vmatprep.subr.mxu0 0.0
  %1068 = vmatpush1.msra.mxu0 0.0
  %1069 = vmatprep.subr.mxu0 0.0
  %1070 = vmatpush1.msra.mxu0 0.0
  %1071 = vmatprep.subr.mxu0 0.0
  %1072 = vmatpush1.msra.mxu0 0.0
  %1073 = vmatprep.subr.mxu0 0.0
  %1074 = vmatpush1.msra.mxu0 0.0
  %1075 = vmatprep.subr.mxu0 0.0
  %1076 = vmatpush1.msra.mxu0 0.0
  %1077 = vmatprep.mubr.f32.mxu0 0.0
  %1078 = vmatmul.mubr.f32.gmra.mrb[0].mxu0 %v1004
  %v1079 = vpop.f32.mrb[0].mxu0
  %v1080 = vadd.f32 0.0, %v1079
  %v1081 = vpop.f32.mrb[0].mxu0
  %v1082 = vadd.f32 0.0, %v1081
  %1083 = vdwg.mxu0
  %1084 = vmatprep.subr.mxu0 %v436
  %1085 = vmatpush1.msra.mxu0 %v435
  %1086 = vmatprep.subr.mxu0 %v440
  %1087 = vmatpush1.msra.mxu0 %v439
  %1088 = vmatprep.subr.mxu0 %v444
  %1089 = vmatpush1.msra.mxu0 %v443
  %1090 = vmatprep.subr.mxu0 %v448
  %1091 = vmatpush1.msra.mxu0 %v447
  %1092 = vmatprep.subr.mxu0 %v452
  %1093 = vmatpush1.msra.mxu0 %v451
  %1094 = vmatprep.subr.mxu0 %v456
  %1095 = vmatpush1.msra.mxu0 %v455
  %1096 = vmatprep.subr.mxu0 %v460
  %1097 = vmatpush1.msra.mxu0 %v459
  %1098 = vmatprep.subr.mxu0 %v464
  %1099 = vmatpush1.msra.mxu0 %v463
  %1100 = vmatprep.subr.mxu0 %v468
  %1101 = vmatpush1.msra.mxu0 %v467
  %1102 = vmatprep.subr.mxu0 %v472
  %1103 = vmatpush1.msra.mxu0 %v471
  %1104 = vmatprep.subr.mxu0 %v476
  %1105 = vmatpush1.msra.mxu0 %v475
  %1106 = vmatprep.subr.mxu0 %v480
  %1107 = vmatpush1.msra.mxu0 %v479
  %1108 = vmatprep.subr.mxu0 %v484
  %1109 = vmatpush1.msra.mxu0 %v483
  %1110 = vmatprep.subr.mxu0 %v488
  %1111 = vmatpush1.msra.mxu0 %v487
  %1112 = vmatprep.subr.mxu0 %v492
  %1113 = vmatpush1.msra.mxu0 %v491
  %1114 = vmatprep.subr.mxu0 %v496
  %1115 = vmatpush1.msra.mxu0 %v495
  %1116 = vmatprep.subr.mxu0 0.0
  %1117 = vmatpush1.msra.mxu0 0.0
  %1118 = vmatprep.subr.mxu0 0.0
  %1119 = vmatpush1.msra.mxu0 0.0
  %1120 = vmatprep.subr.mxu0 0.0
  %1121 = vmatpush1.msra.mxu0 0.0
  %1122 = vmatprep.subr.mxu0 0.0
  %1123 = vmatpush1.msra.mxu0 0.0
  %1124 = vmatprep.subr.mxu0 0.0
  %1125 = vmatpush1.msra.mxu0 0.0
  %1126 = vmatprep.subr.mxu0 0.0
  %1127 = vmatpush1.msra.mxu0 0.0
  %1128 = vmatprep.subr.mxu0 0.0
  %1129 = vmatpush1.msra.mxu0 0.0
  %1130 = vmatprep.subr.mxu0 0.0
  %1131 = vmatpush1.msra.mxu0 0.0
  %1132 = vmatprep.subr.mxu0 0.0
  %1133 = vmatpush1.msra.mxu0 0.0
  %1134 = vmatprep.subr.mxu0 0.0
  %1135 = vmatpush1.msra.mxu0 0.0
  %1136 = vmatprep.subr.mxu0 0.0
  %1137 = vmatpush1.msra.mxu0 0.0
  %1138 = vmatprep.subr.mxu0 0.0
  %1139 = vmatpush1.msra.mxu0 0.0
  %1140 = vmatprep.subr.mxu0 0.0
  %1141 = vmatpush1.msra.mxu0 0.0
  %1142 = vmatprep.subr.mxu0 0.0
  %1143 = vmatpush1.msra.mxu0 0.0
  %1144 = vmatprep.subr.mxu0 0.0
  %1145 = vmatpush1.msra.mxu0 0.0
  %1146 = vmatprep.subr.mxu0 0.0
  %1147 = vmatpush1.msra.mxu0 0.0
  %1148 = vmatprep.mubr.f32.mxu0 0.0
  %1149 = vmatmul.mubr.f32.gmra.mrb[0].mxu0 %v1004
  %v1150 = vpop.f32.mrb[0].mxu0
  %v1151 = vadd.f32 0.0, %v1150
  %v1152 = vpop.f32.mrb[0].mxu0
  %v1153 = vadd.f32 0.0, %v1152
  %1154 = vdwg.mxu0
  %v1155 = vadd.f32 %v1009, %v1080
  %v1156 = vadd.f32 %v1010, %v1082
  %v1157 = vadd.f32 %v1011, %v1151
  %v1158 = vadd.f32 %v1012, %v1153
  %v1159 = vmul.f32 %v1155, 0.5
  %v1160 = vmul.f32 %v1156, 0.5
  %v1161 = vmul.f32 %v1157, 0.5
  %v1162 = vtanh.pop %v1159
  %v1163 = vtanh.pop %v1160
  %v1164 = vtanh.pop %v1161
  %v1165 = vmul.f32 %v1162, 0.5
  %v1166 = vmul.f32 %v1163, 0.5
  %v1167 = vmul.f32 %v1164, 0.5
  %v1168 = vadd.f32 %v1165, 0.5
  %v1169 = vadd.f32 %v1166, 0.5
  %v1170 = vadd.f32 %v1167, 0.5
  %v1171 = vtanh.pop %v1158
  %v1172 = vmul.f32 %v1169, %v1002
  %v1173 = vmul.f32 %v1168, %v1171
  %v1174 = vadd.f32 %v1172, %v1173
  %v1175 = vtanh.pop %v1174
  %v1176 = vmul.f32 %v1170, %v1175
  %v1177 = vmul.f32 %v408, 0.5714286
  %v1178 = vmul.f32 %v412, 0.5714286
  %v1179 = vmul.f32 %v416, 0.5714286
  %v1180 = vmul.f32 %v420, 0.5714286
  %v1181 = vadd.f32 %v327, %v1177
  %v1182 = vadd.f32 %v329, %v1178
  %v1183 = vadd.f32 %v398, %v1179
  %v1184 = vadd.f32 %v400, %v1180
  %1185 = vmatprep.subr.mxu0 %v434
  %1186 = vmatpush1.msra.mxu0 %v433
  %1187 = vmatprep.subr.mxu0 %v438
  %1188 = vmatpush1.msra.mxu0 %v437
  %1189 = vmatprep.subr.mxu0 %v442
  %1190 = vmatpush1.msra.mxu0 %v441
  %1191 = vmatprep.subr.mxu0 %v446
  %1192 = vmatpush1.msra.mxu0 %v445
  %1193 = vmatprep.subr.mxu0 %v450
  %1194 = vmatpush1.msra.mxu0 %v449
  %1195 = vmatprep.subr.mxu0 %v454
  %1196 = vmatpush1.msra.mxu0 %v453
  %1197 = vmatprep.subr.mxu0 %v458
  %1198 = vmatpush1.msra.mxu0 %v457
  %1199 = vmatprep.subr.mxu0 %v462
  %1200 = vmatpush1.msra.mxu0 %v461
  %1201 = vmatprep.subr.mxu0 %v466
  %1202 = vmatpush1.msra.mxu0 %v465
  %1203 = vmatprep.subr.mxu0 %v470
  %1204 = vmatpush1.msra.mxu0 %v469
  %1205 = vmatprep.subr.mxu0 %v474
  %1206 = vmatpush1.msra.mxu0 %v473
  %1207 = vmatprep.subr.mxu0 %v478
  %1208 = vmatpush1.msra.mxu0 %v477
  %1209 = vmatprep.subr.mxu0 %v482
  %1210 = vmatpush1.msra.mxu0 %v481
  %1211 = vmatprep.subr.mxu0 %v486
  %1212 = vmatpush1.msra.mxu0 %v485
  %1213 = vmatprep.subr.mxu0 %v490
  %1214 = vmatpush1.msra.mxu0 %v489
  %1215 = vmatprep.subr.mxu0 %v494
  %1216 = vmatpush1.msra.mxu0 %v493
  %1217 = vmatprep.subr.mxu0 0.0
  %1218 = vmatpush1.msra.mxu0 0.0
  %1219 = vmatprep.subr.mxu0 0.0
  %1220 = vmatpush1.msra.mxu0 0.0
  %1221 = vmatprep.subr.mxu0 0.0
  %1222 = vmatpush1.msra.mxu0 0.0
  %1223 = vmatprep.subr.mxu0 0.0
  %1224 = vmatpush1.msra.mxu0 0.0
  %1225 = vmatprep.subr.mxu0 0.0
  %1226 = vmatpush1.msra.mxu0 0.0
  %1227 = vmatprep.subr.mxu0 0.0
  %1228 = vmatpush1.msra.mxu0 0.0
  %1229 = vmatprep.subr.mxu0 0.0
  %1230 = vmatpush1.msra.mxu0 0.0
  %1231 = vmatprep.subr.mxu0 0.0
  %1232 = vmatpush1.msra.mxu0 0.0
  %1233 = vmatprep.subr.mxu0 0.0
  %1234 = vmatpush1.msra.mxu0 0.0
  %1235 = vmatprep.subr.mxu0 0.0
  %1236 = vmatpush1.msra.mxu0 0.0
  %1237 = vmatprep.subr.mxu0 0.0
  %1238 = vmatpush1.msra.mxu0 0.0
  %1239 = vmatprep.subr.mxu0 0.0
  %1240 = vmatpush1.msra.mxu0 0.0
  %1241 = vmatprep.subr.mxu0 0.0
  %1242 = vmatpush1.msra.mxu0 0.0
  %1243 = vmatprep.subr.mxu0 0.0
  %1244 = vmatpush1.msra.mxu0 0.0
  %1245 = vmatprep.subr.mxu0 0.0
  %1246 = vmatpush1.msra.mxu0 0.0
  %1247 = vmatprep.subr.mxu0 0.0
  %1248 = vmatpush1.msra.mxu0 0.0
  %1249 = vmatprep.mubr.f32.mxu0 0.0
  %1250 = vmatmul.mubr.f32.gmra.mrb[0].mxu0 %v1176
  %v1251 = vpop.f32.mrb[0].mxu0
  %v1252 = vadd.f32 0.0, %v1251
  %v1253 = vpop.f32.mrb[0].mxu0
  %v1254 = vadd.f32 0.0, %v1253
  %1255 = vdwg.mxu0
  %1256 = vmatprep.subr.mxu0 %v436
  %1257 = vmatpush1.msra.mxu0 %v435
  %1258 = vmatprep.subr.mxu0 %v440
  %1259 = vmatpush1.msra.mxu0 %v439
  %1260 = vmatprep.subr.mxu0 %v444
  %1261 = vmatpush1.msra.mxu0 %v443
  %1262 = vmatprep.subr.mxu0 %v448
  %1263 = vmatpush1.msra.mxu0 %v447
  %1264 = vmatprep.subr.mxu0 %v452
  %1265 = vmatpush1.msra.mxu0 %v451
  %1266 = vmatprep.subr.mxu0 %v456
  %1267 = vmatpush1.msra.mxu0 %v455
  %1268 = vmatprep.subr.mxu0 %v460
  %1269 = vmatpush1.msra.mxu0 %v459
  %1270 = vmatprep.subr.mxu0 %v464
  %1271 = vmatpush1.msra.mxu0 %v463
  %1272 = vmatprep.subr.mxu0 %v468
  %1273 = vmatpush1.msra.mxu0 %v467
  %1274 = vmatprep.subr.mxu0 %v472
  %1275 = vmatpush1.msra.mxu0 %v471
  %1276 = vmatprep.subr.mxu0 %v476
  %1277 = vmatpush1.msra.mxu0 %v475
  %1278 = vmatprep.subr.mxu0 %v480
  %1279 = vmatpush1.msra.mxu0 %v479
  %1280 = vmatprep.subr.mxu0 %v484
  %1281 = vmatpush1.msra.mxu0 %v483
  %1282 = vmatprep.subr.mxu0 %v488
  %1283 = vmatpush1.msra.mxu0 %v487
  %1284 = vmatprep.subr.mxu0 %v492
  %1285 = vmatpush1.msra.mxu0 %v491
  %1286 = vmatprep.subr.mxu0 %v496
  %1287 = vmatpush1.msra.mxu0 %v495
  %1288 = vmatprep.subr.mxu0 0.0
  %1289 = vmatpush1.msra.mxu0 0.0
  %1290 = vmatprep.subr.mxu0 0.0
  %1291 = vmatpush1.msra.mxu0 0.0
  %1292 = vmatprep.subr.mxu0 0.0
  %1293 = vmatpush1.msra.mxu0 0.0
  %1294 = vmatprep.subr.mxu0 0.0
  %1295 = vmatpush1.msra.mxu0 0.0
  %1296 = vmatprep.subr.mxu0 0.0
  %1297 = vmatpush1.msra.mxu0 0.0
  %1298 = vmatprep.subr.mxu0 0.0
  %1299 = vmatpush1.msra.mxu0 0.0
  %1300 = vmatprep.subr.mxu0 0.0
  %1301 = vmatpush1.msra.mxu0 0.0
  %1302 = vmatprep.subr.mxu0 0.0
  %1303 = vmatpush1.msra.mxu0 0.0
  %1304 = vmatprep.subr.mxu0 0.0
  %1305 = vmatpush1.msra.mxu0 0.0
  %1306 = vmatprep.subr.mxu0 0.0
  %1307 = vmatpush1.msra.mxu0 0.0
  %1308 = vmatprep.subr.mxu0 0.0
  %1309 = vmatpush1.msra.mxu0 0.0
  %1310 = vmatprep.subr.mxu0 0.0
  %1311 = vmatpush1.msra.mxu0 0.0
  %1312 = vmatprep.subr.mxu0 0.0
  %1313 = vmatpush1.msra.mxu0 0.0
  %1314 = vmatprep.subr.mxu0 0.0
  %1315 = vmatpush1.msra.mxu0 0.0
  %1316 = vmatprep.subr.mxu0 0.0
  %1317 = vmatpush1.msra.mxu0 0.0
  %1318 = vmatprep.subr.mxu0 0.0
  %1319 = vmatpush1.msra.mxu0 0.0
  %1320 = vmatprep.mubr.f32.mxu0 0.0
  %1321 = vmatmul.mubr.f32.gmra.mrb[0].mxu0 %v1176
  %v1322 = vpop.f32.mrb[0].mxu0
  %v1323 = vadd.f32 0.0, %v1322
  %v1324 = vpop.f32.mrb[0].mxu0
  %v1325 = vadd.f32 0.0, %v1324
  %1326 = vdwg.mxu0
  %v1327 = vadd.f32 %v1181, %v1252
  %v1328 = vadd.f32 %v1182, %v1254
  %v1329 = vadd.f32 %v1183, %v1323
  %v1330 = vadd.f32 %v1184, %v1325
  %v1331 = vmul.f32 %v1327, 0.5
  %v1332 = vmul.f32 %v1328, 0.5
  %v1333 = vmul.f32 %v1329, 0.5
  %v1334 = vtanh.pop %v1331
  %v1335 = vtanh.pop %v1332
  %v1336 = vtanh.pop %v1333
  %v1337 = vmul.f32 %v1334, 0.5
  %v1338 = vmul.f32 %v1335, 0.5
  %v1339 = vmul.f32 %v1336, 0.5
  %v1340 = vadd.f32 %v1337, 0.5
  %v1341 = vadd.f32 %v1338, 0.5
  %v1342 = vadd.f32 %v1339, 0.5
  %v1343 = vtanh.pop %v1330
  %v1344 = vmul.f32 %v1341, %v1174
  %v1345 = vmul.f32 %v1340, %v1343
  %v1346 = vadd.f32 %v1344, %v1345
  %v1347 = vtanh.pop %v1346
  %v1348 = vmul.f32 %v1342, %v1347
  %v1349 = vmul.f32 %v408, 0.71428573
  %v1350 = vmul.f32 %v412, 0.71428573
  %v1351 = vmul.f32 %v416, 0.71428573
  %v1352 = vmul.f32 %v420, 0.71428573
  %v1353 = vadd.f32 %v327, %v1349
  %v1354 = vadd.f32 %v329, %v1350
  %v1355 = vadd.f32 %v398, %v1351
  %v1356 = vadd.f32 %v400, %v1352
  %1357 = vmatprep.subr.mxu0 %v434
  %1358 = vmatpush1.msra.mxu0 %v433
  %1359 = vmatprep.subr.mxu0 %v438
  %1360 = vmatpush1.msra.mxu0 %v437
  %1361 = vmatprep.subr.mxu0 %v442
  %1362 = vmatpush1.msra.mxu0 %v441
  %1363 = vmatprep.subr.mxu0 %v446
  %1364 = vmatpush1.msra.mxu0 %v445
  %1365 = vmatprep.subr.mxu0 %v450
  %1366 = vmatpush1.msra.mxu0 %v449
  %1367 = vmatprep.subr.mxu0 %v454
  %1368 = vmatpush1.msra.mxu0 %v453
  %1369 = vmatprep.subr.mxu0 %v458
  %1370 = vmatpush1.msra.mxu0 %v457
  %1371 = vmatprep.subr.mxu0 %v462
  %1372 = vmatpush1.msra.mxu0 %v461
  %1373 = vmatprep.subr.mxu0 %v466
  %1374 = vmatpush1.msra.mxu0 %v465
  %1375 = vmatprep.subr.mxu0 %v470
  %1376 = vmatpush1.msra.mxu0 %v469
  %1377 = vmatprep.subr.mxu0 %v474
  %1378 = vmatpush1.msra.mxu0 %v473
  %1379 = vmatprep.subr.mxu0 %v478
  %1380 = vmatpush1.msra.mxu0 %v477
  %1381 = vmatprep.subr.mxu0 %v482
  %1382 = vmatpush1.msra.mxu0 %v481
  %1383 = vmatprep.subr.mxu0 %v486
  %1384 = vmatpush1.msra.mxu0 %v485
  %1385 = vmatprep.subr.mxu0 %v490
  %1386 = vmatpush1.msra.mxu0 %v489
  %1387 = vmatprep.subr.mxu0 %v494
  %1388 = vmatpush1.msra.mxu0 %v493
  %1389 = vmatprep.subr.mxu0 0.0
  %1390 = vmatpush1.msra.mxu0 0.0
  %1391 = vmatprep.subr.mxu0 0.0
  %1392 = vmatpush1.msra.mxu0 0.0
  %1393 = vmatprep.subr.mxu0 0.0
  %1394 = vmatpush1.msra.mxu0 0.0
  %1395 = vmatprep.subr.mxu0 0.0
  %1396 = vmatpush1.msra.mxu0 0.0
  %1397 = vmatprep.subr.mxu0 0.0
  %1398 = vmatpush1.msra.mxu0 0.0
  %1399 = vmatprep.subr.mxu0 0.0
  %1400 = vmatpush1.msra.mxu0 0.0
  %1401 = vmatprep.subr.mxu0 0.0
  %1402 = vmatpush1.msra.mxu0 0.0
  %1403 = vmatprep.subr.mxu0 0.0
  %1404 = vmatpush1.msra.mxu0 0.0
  %1405 = vmatprep.subr.mxu0 0.0
  %1406 = vmatpush1.msra.mxu0 0.0
  %1407 = vmatprep.subr.mxu0 0.0
  %1408 = vmatpush1.msra.mxu0 0.0
  %1409 = vmatprep.subr.mxu0 0.0
  %1410 = vmatpush1.msra.mxu0 0.0
  %1411 = vmatprep.subr.mxu0 0.0
  %1412 = vmatpush1.msra.mxu0 0.0
  %1413 = vmatprep.subr.mxu0 0.0
  %1414 = vmatpush1.msra.mxu0 0.0
  %1415 = vmatprep.subr.mxu0 0.0
  %1416 = vmatpush1.msra.mxu0 0.0
  %1417 = vmatprep.subr.mxu0 0.0
  %1418 = vmatpush1.msra.mxu0 0.0
  %1419 = vmatprep.subr.mxu0 0.0
  %1420 = vmatpush1.msra.mxu0 0.0
  %1421 = vmatprep.mubr.f32.mxu0 0.0
  %1422 = vmatmul.mubr.f32.gmra.mrb[0].mxu0 %v1348
  %v1423 = vpop.f32.mrb[0].mxu0
  %v1424 = vadd.f32 0.0, %v1423
  %v1425 = vpop.f32.mrb[0].mxu0
  %v1426 = vadd.f32 0.0, %v1425
  %1427 = vdwg.mxu0
  %1428 = vmatprep.subr.mxu0 %v436
  %1429 = vmatpush1.msra.mxu0 %v435
  %1430 = vmatprep.subr.mxu0 %v440
  %1431 = vmatpush1.msra.mxu0 %v439
  %1432 = vmatprep.subr.mxu0 %v444
  %1433 = vmatpush1.msra.mxu0 %v443
  %1434 = vmatprep.subr.mxu0 %v448
  %1435 = vmatpush1.msra.mxu0 %v447
  %1436 = vmatprep.subr.mxu0 %v452
  %1437 = vmatpush1.msra.mxu0 %v451
  %1438 = vmatprep.subr.mxu0 %v456
  %1439 = vmatpush1.msra.mxu0 %v455
  %1440 = vmatprep.subr.mxu0 %v460
  %1441 = vmatpush1.msra.mxu0 %v459
  %1442 = vmatprep.subr.mxu0 %v464
  %1443 = vmatpush1.msra.mxu0 %v463
  %1444 = vmatprep.subr.mxu0 %v468
  %1445 = vmatpush1.msra.mxu0 %v467
  %1446 = vmatprep.subr.mxu0 %v472
  %1447 = vmatpush1.msra.mxu0 %v471
  %1448 = vmatprep.subr.mxu0 %v476
  %1449 = vmatpush1.msra.mxu0 %v475
  %1450 = vmatprep.subr.mxu0 %v480
  %1451 = vmatpush1.msra.mxu0 %v479
  %1452 = vmatprep.subr.mxu0 %v484
  %1453 = vmatpush1.msra.mxu0 %v483
  %1454 = vmatprep.subr.mxu0 %v488
  %1455 = vmatpush1.msra.mxu0 %v487
  %1456 = vmatprep.subr.mxu0 %v492
  %1457 = vmatpush1.msra.mxu0 %v491
  %1458 = vmatprep.subr.mxu0 %v496
  %1459 = vmatpush1.msra.mxu0 %v495
  %1460 = vmatprep.subr.mxu0 0.0
  %1461 = vmatpush1.msra.mxu0 0.0
  %1462 = vmatprep.subr.mxu0 0.0
  %1463 = vmatpush1.msra.mxu0 0.0
  %1464 = vmatprep.subr.mxu0 0.0
  %1465 = vmatpush1.msra.mxu0 0.0
  %1466 = vmatprep.subr.mxu0 0.0
  %1467 = vmatpush1.msra.mxu0 0.0
  %1468 = vmatprep.subr.mxu0 0.0
  %1469 = vmatpush1.msra.mxu0 0.0
  %1470 = vmatprep.subr.mxu0 0.0
  %1471 = vmatpush1.msra.mxu0 0.0
  %1472 = vmatprep.subr.mxu0 0.0
  %1473 = vmatpush1.msra.mxu0 0.0
  %1474 = vmatprep.subr.mxu0 0.0
  %1475 = vmatpush1.msra.mxu0 0.0
  %1476 = vmatprep.subr.mxu0 0.0
  %1477 = vmatpush1.msra.mxu0 0.0
  %1478 = vmatprep.subr.mxu0 0.0
  %1479 = vmatpush1.msra.mxu0 0.0
  %1480 = vmatprep.subr.mxu0 0.0
  %1481 = vmatpush1.msra.mxu0 0.0
  %1482 = vmatprep.subr.mxu0 0.0
  %1483 = vmatpush1.msra.mxu0 0.0
  %1484 = vmatprep.subr.mxu0 0.0
  %1485 = vmatpush1.msra.mxu0 0.0
  %1486 = vmatprep.subr.mxu0 0.0
  %1487 = vmatpush1.msra.mxu0 0.0
  %1488 = vmatprep.subr.mxu0 0.0
  %1489 = vmatpush1.msra.mxu0 0.0
  %1490 = vmatprep.subr.mxu0 0.0
  %1491 = vmatpush1.msra.mxu0 0.0
  %1492 = vmatprep.mubr.f32.mxu0 0.0
  %1493 = vmatmul.mubr.f32.gmra.mrb[0].mxu0 %v1348
  %v1494 = vpop.f32.mrb[0].mxu0
  %v1495 = vadd.f32 0.0, %v1494
  %v1496 = vpop.f32.mrb[0].mxu0
  %v1497 = vadd.f32 0.0, %v1496
  %1498 = vdwg.mxu0
  %v1499 = vadd.f32 %v1353, %v1424
  %v1500 = vadd.f32 %v1354, %v1426
  %v1501 = vadd.f32 %v1355, %v1495
  %v1502 = vadd.f32 %v1356, %v1497
  %v1503 = vmul.f32 %v1499, 0.5
  %v1504 = vmul.f32 %v1500, 0.5
  %v1505 = vmul.f32 %v1501, 0.5
  %v1506 = vtanh.pop %v1503
  %v1507 = vtanh.pop %v1504
  %v1508 = vtanh.pop %v1505
  %v1509 = vmul.f32 %v1506, 0.5
  %v1510 = vmul.f32 %v1507, 0.5
  %v1511 = vmul.f32 %v1508, 0.5
  %v1512 = vadd.f32 %v1509, 0.5
  %v1513 = vadd.f32 %v1510, 0.5
  %v1514 = vadd.f32 %v1511, 0.5
  %v1515 = vtanh.pop %v1502
  %v1516 = vmul.f32 %v1513, %v1346
  %v1517 = vmul.f32 %v1512, %v1515
  %v1518 = vadd.f32 %v1516, %v1517
  %v1519 = vtanh.pop %v1518
  %v1520 = vmul.f32 %v1514, %v1519
  %v1521 = vmul.f32 %v408, 0.85714287
  %v1522 = vmul.f32 %v412, 0.85714287
  %v1523 = vmul.f32 %v416, 0.85714287
  %v1524 = vmul.f32 %v420, 0.85714287
  %v1525 = vadd.f32 %v327, %v1521
  %v1526 = vadd.f32 %v329, %v1522
  %v1527 = vadd.f32 %v398, %v1523
  %v1528 = vadd.f32 %v400, %v1524
  %1529 = vmatprep.subr.mxu0 %v434
  %1530 = vmatpush1.msra.mxu0 %v433
  %1531 = vmatprep.subr.mxu0 %v438
  %1532 = vmatpush1.msra.mxu0 %v437
  %1533 = vmatprep.subr.mxu0 %v442
  %1534 = vmatpush1.msra.mxu0 %v441
  %1535 = vmatprep.subr.mxu0 %v446
  %1536 = vmatpush1.msra.mxu0 %v445
  %1537 = vmatprep.subr.mxu0 %v450
  %1538 = vmatpush1.msra.mxu0 %v449
  %1539 = vmatprep.subr.mxu0 %v454
  %1540 = vmatpush1.msra.mxu0 %v453
  %1541 = vmatprep.subr.mxu0 %v458
  %1542 = vmatpush1.msra.mxu0 %v457
  %1543 = vmatprep.subr.mxu0 %v462
  %1544 = vmatpush1.msra.mxu0 %v461
  %1545 = vmatprep.subr.mxu0 %v466
  %1546 = vmatpush1.msra.mxu0 %v465
  %1547 = vmatprep.subr.mxu0 %v470
  %1548 = vmatpush1.msra.mxu0 %v469
  %1549 = vmatprep.subr.mxu0 %v474
  %1550 = vmatpush1.msra.mxu0 %v473
  %1551 = vmatprep.subr.mxu0 %v478
  %1552 = vmatpush1.msra.mxu0 %v477
  %1553 = vmatprep.subr.mxu0 %v482
  %1554 = vmatpush1.msra.mxu0 %v481
  %1555 = vmatprep.subr.mxu0 %v486
  %1556 = vmatpush1.msra.mxu0 %v485
  %1557 = vmatprep.subr.mxu0 %v490
  %1558 = vmatpush1.msra.mxu0 %v489
  %1559 = vmatprep.subr.mxu0 %v494
  %1560 = vmatpush1.msra.mxu0 %v493
  %1561 = vmatprep.subr.mxu0 0.0
  %1562 = vmatpush1.msra.mxu0 0.0
  %1563 = vmatprep.subr.mxu0 0.0
  %1564 = vmatpush1.msra.mxu0 0.0
  %1565 = vmatprep.subr.mxu0 0.0
  %1566 = vmatpush1.msra.mxu0 0.0
  %1567 = vmatprep.subr.mxu0 0.0
  %1568 = vmatpush1.msra.mxu0 0.0
  %1569 = vmatprep.subr.mxu0 0.0
  %1570 = vmatpush1.msra.mxu0 0.0
  %1571 = vmatprep.subr.mxu0 0.0
  %1572 = vmatpush1.msra.mxu0 0.0
  %1573 = vmatprep.subr.mxu0 0.0
  %1574 = vmatpush1.msra.mxu0 0.0
  %1575 = vmatprep.subr.mxu0 0.0
  %1576 = vmatpush1.msra.mxu0 0.0
  %1577 = vmatprep.subr.mxu0 0.0
  %1578 = vmatpush1.msra.mxu0 0.0
  %1579 = vmatprep.subr.mxu0 0.0
  %1580 = vmatpush1.msra.mxu0 0.0
  %1581 = vmatprep.subr.mxu0 0.0
  %1582 = vmatpush1.msra.mxu0 0.0
  %1583 = vmatprep.subr.mxu0 0.0
  %1584 = vmatpush1.msra.mxu0 0.0
  %1585 = vmatprep.subr.mxu0 0.0
  %1586 = vmatpush1.msra.mxu0 0.0
  %1587 = vmatprep.subr.mxu0 0.0
  %1588 = vmatpush1.msra.mxu0 0.0
  %1589 = vmatprep.subr.mxu0 0.0
  %1590 = vmatpush1.msra.mxu0 0.0
  %1591 = vmatprep.subr.mxu0 0.0
  %1592 = vmatpush1.msra.mxu0 0.0
  %1593 = vmatprep.mubr.f32.mxu0 0.0
  %1594 = vmatmul.mubr.f32.gmra.mrb[0].mxu0 %v1520
  %v1595 = vpop.f32.mrb[0].mxu0
  %v1596 = vadd.f32 0.0, %v1595
  %v1597 = vpop.f32.mrb[0].mxu0
  %v1598 = vadd.f32 0.0, %v1597
  %1599 = vdwg.mxu0
  %1600 = vmatprep.subr.mxu0 %v436
  %1601 = vmatpush1.msra.mxu0 %v435
  %1602 = vmatprep.subr.mxu0 %v440
  %1603 = vmatpush1.msra.mxu0 %v439
  %1604 = vmatprep.subr.mxu0 %v444
  %1605 = vmatpush1.msra.mxu0 %v443
  %1606 = vmatprep.subr.mxu0 %v448
  %1607 = vmatpush1.msra.mxu0 %v447
  %1608 = vmatprep.subr.mxu0 %v452
  %1609 = vmatpush1.msra.mxu0 %v451
  %1610 = vmatprep.subr.mxu0 %v456
  %1611 = vmatpush1.msra.mxu0 %v455
  %1612 = vmatprep.subr.mxu0 %v460
  %1613 = vmatpush1.msra.mxu0 %v459
  %1614 = vmatprep.subr.mxu0 %v464
  %1615 = vmatpush1.msra.mxu0 %v463
  %1616 = vmatprep.subr.mxu0 %v468
  %1617 = vmatpush1.msra.mxu0 %v467
  %1618 = vmatprep.subr.mxu0 %v472
  %1619 = vmatpush1.msra.mxu0 %v471
  %1620 = vmatprep.subr.mxu0 %v476
  %1621 = vmatpush1.msra.mxu0 %v475
  %1622 = vmatprep.subr.mxu0 %v480
  %1623 = vmatpush1.msra.mxu0 %v479
  %1624 = vmatprep.subr.mxu0 %v484
  %1625 = vmatpush1.msra.mxu0 %v483
  %1626 = vmatprep.subr.mxu0 %v488
  %1627 = vmatpush1.msra.mxu0 %v487
  %1628 = vmatprep.subr.mxu0 %v492
  %1629 = vmatpush1.msra.mxu0 %v491
  %1630 = vmatprep.subr.mxu0 %v496
  %1631 = vmatpush1.msra.mxu0 %v495
  %1632 = vmatprep.subr.mxu0 0.0
  %1633 = vmatpush1.msra.mxu0 0.0
  %1634 = vmatprep.subr.mxu0 0.0
  %1635 = vmatpush1.msra.mxu0 0.0
  %1636 = vmatprep.subr.mxu0 0.0
  %1637 = vmatpush1.msra.mxu0 0.0
  %1638 = vmatprep.subr.mxu0 0.0
  %1639 = vmatpush1.msra.mxu0 0.0
  %1640 = vmatprep.subr.mxu0 0.0
  %1641 = vmatpush1.msra.mxu0 0.0
  %1642 = vmatprep.subr.mxu0 0.0
  %1643 = vmatpush1.msra.mxu0 0.0
  %1644 = vmatprep.subr.mxu0 0.0
  %1645 = vmatpush1.msra.mxu0 0.0
  %1646 = vmatprep.subr.mxu0 0.0
  %1647 = vmatpush1.msra.mxu0 0.0
  %1648 = vmatprep.subr.mxu0 0.0
  %1649 = vmatpush1.msra.mxu0 0.0
  %1650 = vmatprep.subr.mxu0 0.0
  %1651 = vmatpush1.msra.mxu0 0.0
  %1652 = vmatprep.subr.mxu0 0.0
  %1653 = vmatpush1.msra.mxu0 0.0
  %1654 = vmatprep.subr.mxu0 0.0
  %1655 = vmatpush1.msra.mxu0 0.0
  %1656 = vmatprep.subr.mxu0 0.0
  %1657 = vmatpush1.msra.mxu0 0.0
  %1658 = vmatprep.subr.mxu0 0.0
  %1659 = vmatpush1.msra.mxu0 0.0
  %1660 = vmatprep.subr.mxu0 0.0
  %1661 = vmatpush1.msra.mxu0 0.0
  %1662 = vmatprep.subr.mxu0 0.0
  %1663 = vmatpush1.msra.mxu0 0.0
  %1664 = vmatprep.mubr.f32.mxu0 0.0
  %1665 = vmatmul.mubr.f32.gmra.mrb[0].mxu0 %v1520
  %v1666 = vpop.f32.mrb[0].mxu0
  %v1667 = vadd.f32 0.0, %v1666
  %v1668 = vpop.f32.mrb[0].mxu0
  %v1669 = vadd.f32 0.0, %v1668
  %1670 = vdwg.mxu0
  %v1671 = vadd.f32 %v1525, %v1596
  %v1672 = vadd.f32 %v1526, %v1598
  %v1673 = vadd.f32 %v1527, %v1667
  %v1674 = vadd.f32 %v1528, %v1669
  %v1675 = vmul.f32 %v1671, 0.5
  %v1676 = vmul.f32 %v1672, 0.5
  %v1677 = vmul.f32 %v1673, 0.5
  %v1678 = vtanh.pop %v1675
  %v1679 = vtanh.pop %v1676
  %v1680 = vtanh.pop %v1677
  %v1681 = vmul.f32 %v1678, 0.5
  %v1682 = vmul.f32 %v1679, 0.5
  %v1683 = vmul.f32 %v1680, 0.5
  %v1684 = vadd.f32 %v1681, 0.5
  %v1685 = vadd.f32 %v1682, 0.5
  %v1686 = vadd.f32 %v1683, 0.5
  %v1687 = vtanh.pop %v1674
  %v1688 = vmul.f32 %v1685, %v1518
  %v1689 = vmul.f32 %v1684, %v1687
  %v1690 = vadd.f32 %v1688, %v1689
  %v1691 = vtanh.pop %v1690
  %v1692 = vmul.f32 %v1686, %v1691
  %v1693 = vadd.f32 %v327, %v408
  %v1694 = vadd.f32 %v329, %v412
  %v1695 = vadd.f32 %v398, %v416
  %v1696 = vadd.f32 %v400, %v420
  %1697 = vmatprep.subr.mxu0 %v434
  %1698 = vmatpush1.msra.mxu0 %v433
  %1699 = vmatprep.subr.mxu0 %v438
  %1700 = vmatpush1.msra.mxu0 %v437
  %1701 = vmatprep.subr.mxu0 %v442
  %1702 = vmatpush1.msra.mxu0 %v441
  %1703 = vmatprep.subr.mxu0 %v446
  %1704 = vmatpush1.msra.mxu0 %v445
  %1705 = vmatprep.subr.mxu0 %v450
  %1706 = vmatpush1.msra.mxu0 %v449
  %1707 = vmatprep.subr.mxu0 %v454
  %1708 = vmatpush1.msra.mxu0 %v453
  %1709 = vmatprep.subr.mxu0 %v458
  %1710 = vmatpush1.msra.mxu0 %v457
  %1711 = vmatprep.subr.mxu0 %v462
  %1712 = vmatpush1.msra.mxu0 %v461
  %1713 = vmatprep.subr.mxu0 %v466
  %1714 = vmatpush1.msra.mxu0 %v465
  %1715 = vmatprep.subr.mxu0 %v470
  %1716 = vmatpush1.msra.mxu0 %v469
  %1717 = vmatprep.subr.mxu0 %v474
  %1718 = vmatpush1.msra.mxu0 %v473
  %1719 = vmatprep.subr.mxu0 %v478
  %1720 = vmatpush1.msra.mxu0 %v477
  %1721 = vmatprep.subr.mxu0 %v482
  %1722 = vmatpush1.msra.mxu0 %v481
  %1723 = vmatprep.subr.mxu0 %v486
  %1724 = vmatpush1.msra.mxu0 %v485
  %1725 = vmatprep.subr.mxu0 %v490
  %1726 = vmatpush1.msra.mxu0 %v489
  %1727 = vmatprep.subr.mxu0 %v494
  %1728 = vmatpush1.msra.mxu0 %v493
  %1729 = vmatprep.subr.mxu0 0.0
  %1730 = vmatpush1.msra.mxu0 0.0
  %1731 = vmatprep.subr.mxu0 0.0
  %1732 = vmatpush1.msra.mxu0 0.0
  %1733 = vmatprep.subr.mxu0 0.0
  %1734 = vmatpush1.msra.mxu0 0.0
  %1735 = vmatprep.subr.mxu0 0.0
  %1736 = vmatpush1.msra.mxu0 0.0
  %1737 = vmatprep.subr.mxu0 0.0
  %1738 = vmatpush1.msra.mxu0 0.0
  %1739 = vmatprep.subr.mxu0 0.0
  %1740 = vmatpush1.msra.mxu0 0.0
  %1741 = vmatprep.subr.mxu0 0.0
  %1742 = vmatpush1.msra.mxu0 0.0
  %1743 = vmatprep.subr.mxu0 0.0
  %1744 = vmatpush1.msra.mxu0 0.0
  %1745 = vmatprep.subr.mxu0 0.0
  %1746 = vmatpush1.msra.mxu0 0.0
  %1747 = vmatprep.subr.mxu0 0.0
  %1748 = vmatpush1.msra.mxu0 0.0
  %1749 = vmatprep.subr.mxu0 0.0
  %1750 = vmatpush1.msra.mxu0 0.0
  %1751 = vmatprep.subr.mxu0 0.0
  %1752 = vmatpush1.msra.mxu0 0.0
  %1753 = vmatprep.subr.mxu0 0.0
  %1754 = vmatpush1.msra.mxu0 0.0
  %1755 = vmatprep.subr.mxu0 0.0
  %1756 = vmatpush1.msra.mxu0 0.0
  %1757 = vmatprep.subr.mxu0 0.0
  %1758 = vmatpush1.msra.mxu0 0.0
  %1759 = vmatprep.subr.mxu0 0.0
  %1760 = vmatpush1.msra.mxu0 0.0
  %1761 = vmatprep.mubr.f32.mxu0 0.0
  %1762 = vmatmul.mubr.f32.gmra.mrb[0].mxu0 %v1692
  %v1763 = vpop.f32.mrb[0].mxu0
  %v1764 = vadd.f32 0.0, %v1763
  %v1765 = vpop.f32.mrb[0].mxu0
  %v1766 = vadd.f32 0.0, %v1765
  %1767 = vdwg.mxu0
  %1768 = vmatprep.subr.mxu0 %v436
  %1769 = vmatpush1.msra.mxu0 %v435
  %1770 = vmatprep.subr.mxu0 %v440
  %1771 = vmatpush1.msra.mxu0 %v439
  %1772 = vmatprep.subr.mxu0 %v444
  %1773 = vmatpush1.msra.mxu0 %v443
  %1774 = vmatprep.subr.mxu0 %v448
  %1775 = vmatpush1.msra.mxu0 %v447
  %1776 = vmatprep.subr.mxu0 %v452
  %1777 = vmatpush1.msra.mxu0 %v451
  %1778 = vmatprep.subr.mxu0 %v456
  %1779 = vmatpush1.msra.mxu0 %v455
  %1780 = vmatprep.subr.mxu0 %v460
  %1781 = vmatpush1.msra.mxu0 %v459
  %1782 = vmatprep.subr.mxu0 %v464
  %1783 = vmatpush1.msra.mxu0 %v463
  %1784 = vmatprep.subr.mxu0 %v468
  %1785 = vmatpush1.msra.mxu0 %v467
  %1786 = vmatprep.subr.mxu0 %v472
  %1787 = vmatpush1.msra.mxu0 %v471
  %1788 = vmatprep.subr.mxu0 %v476
  %1789 = vmatpush1.msra.mxu0 %v475
  %1790 = vmatprep.subr.mxu0 %v480
  %1791 = vmatpush1.msra.mxu0 %v479
  %1792 = vmatprep.subr.mxu0 %v484
  %1793 = vmatpush1.msra.mxu0 %v483
  %1794 = vmatprep.subr.mxu0 %v488
  %1795 = vmatpush1.msra.mxu0 %v487
  %1796 = vmatprep.subr.mxu0 %v492
  %1797 = vmatpush1.msra.mxu0 %v491
  %1798 = vmatprep.subr.mxu0 %v496
  %1799 = vmatpush1.msra.mxu0 %v495
  %1800 = vmatprep.subr.mxu0 0.0
  %1801 = vmatpush1.msra.mxu0 0.0
  %1802 = vmatprep.subr.mxu0 0.0
  %1803 = vmatpush1.msra.mxu0 0.0
  %1804 = vmatprep.subr.mxu0 0.0
  %1805 = vmatpush1.msra.mxu0 0.0
  %1806 = vmatprep.subr.mxu0 0.0
  %1807 = vmatpush1.msra.mxu0 0.0
  %1808 = vmatprep.subr.mxu0 0.0
  %1809 = vmatpush1.msra.mxu0 0.0
  %1810 = vmatprep.subr.mxu0 0.0
  %1811 = vmatpush1.msra.mxu0 0.0
  %1812 = vmatprep.subr.mxu0 0.0
  %1813 = vmatpush1.msra.mxu0 0.0
  %1814 = vmatprep.subr.mxu0 0.0
  %1815 = vmatpush1.msra.mxu0 0.0
  %1816 = vmatprep.subr.mxu0 0.0
  %1817 = vmatpush1.msra.mxu0 0.0
  %1818 = vmatprep.subr.mxu0 0.0
  %1819 = vmatpush1.msra.mxu0 0.0
  %1820 = vmatprep.subr.mxu0 0.0
  %1821 = vmatpush1.msra.mxu0 0.0
  %1822 = vmatprep.subr.mxu0 0.0
  %1823 = vmatpush1.msra.mxu0 0.0
  %1824 = vmatprep.subr.mxu0 0.0
  %1825 = vmatpush1.msra.mxu0 0.0
  %1826 = vmatprep.subr.mxu0 0.0
  %1827 = vmatpush1.msra.mxu0 0.0
  %1828 = vmatprep.subr.mxu0 0.0
  %1829 = vmatpush1.msra.mxu0 0.0
  %1830 = vmatprep.subr.mxu0 0.0
  %1831 = vmatpush1.msra.mxu0 0.0
  %1832 = vmatprep.mubr.f32.mxu0 0.0
  %1833 = vmatmul.mubr.f32.gmra.mrb[0].mxu0 %v1692
  %v1834 = vpop.f32.mrb[0].mxu0
  %v1835 = vadd.f32 0.0, %v1834
  %v1836 = vpop.f32.mrb[0].mxu0
  %v1837 = vadd.f32 0.0, %v1836
  %1838 = vdwg.mxu0
  %v1839 = vadd.f32 %v1693, %v1764
  %v1840 = vadd.f32 %v1694, %v1766
  %v1841 = vadd.f32 %v1695, %v1835
  %v1842 = vadd.f32 %v1696, %v1837
  %v1843 = vmul.f32 %v1839, 0.5
  %v1844 = vmul.f32 %v1840, 0.5
  %v1845 = vmul.f32 %v1841, 0.5
  %v1846 = vtanh.pop %v1843
  %v1847 = vtanh.pop %v1844
  %v1848 = vtanh.pop %v1845
  %v1849 = vmul.f32 %v1846, 0.5
  %v1850 = vmul.f32 %v1847, 0.5
  %v1851 = vmul.f32 %v1848, 0.5
  %v1852 = vadd.f32 %v1849, 0.5
  %v1853 = vadd.f32 %v1850, 0.5
  %v1854 = vadd.f32 %v1851, 0.5
  %v1855 = vtanh.pop %v1842
  %v1856 = vmul.f32 %v1853, %v1690
  %v1857 = vmul.f32 %v1852, %v1855
  %v1858 = vadd.f32 %v1856, %v1857
  %v1859 = vtanh.pop %v1858
  %v1860 = vmul.f32 %v1854, %v1859
  %v1861 = vld [vmem:[%s7] sm:$0xff]
  %v1862 = vld [vmem:[%s7 + $0x8] sm:$0xff]
  %v1863 = vld [vmem:[%s7 + $0x10] sm:$0xff]
  %v1864 = vld [vmem:[%s7 + $0x18] sm:$0xff]
  %v1865 = vld [vmem:[%s7 + $0x20] sm:$0xff]
  %v1866 = vld [vmem:[%s7 + $0x28] sm:$0xff]
  %v1867 = vld [vmem:[%s7 + $0x30] sm:$0xff]
  %v1868 = vld [vmem:[%s7 + $0x38] sm:$0xff]
  %v1869 = vld [vmem:[%s7 + $0x40] sm:$0xff]
  %v1870 = vld [vmem:[%s7 + $0x48] sm:$0xff]
  %v1871 = vld [vmem:[%s7 + $0x50] sm:$0xff]
  %v1872 = vld [vmem:[%s7 + $0x58] sm:$0xff]
  %v1873 = vld [vmem:[%s7 + $0x60] sm:$0xff]
  %v1874 = vld [vmem:[%s7 + $0x68] sm:$0xff]
  %v1875 = vld [vmem:[%s7 + $0x70] sm:$0xff]
  %v1876 = vld [vmem:[%s7 + $0x78] sm:$0xff]
  %v1877 = vld [vmem:[%s7 + $0x80] sm:$0xff]
  %v1878 = vld [vmem:[%s7 + $0x88] sm:$0xff]
  %v1879 = vld [vmem:[%s7 + $0x90] sm:$0xff]
  %v1880 = vld [vmem:[%s7 + $0x98] sm:$0xff]
  %v1881 = vld [vmem:[%s7 + $0xa0] sm:$0xff]
  %v1882 = vld [vmem:[%s7 + $0xa8] sm:$0xff]
  %v1883 = vld [vmem:[%s7 + $0xb0] sm:$0xff]
  %v1884 = vld [vmem:[%s7 + $0xb8] sm:$0xff]
  %v1885 = vld [vmem:[%s7 + $0xc0] sm:$0xff]
  %v1886 = vld [vmem:[%s7 + $0xc8] sm:$0xff]
  %v1887 = vld [vmem:[%s7 + $0xd0] sm:$0xff]
  %v1888 = vld [vmem:[%s7 + $0xd8] sm:$0xff]
  %v1889 = vld [vmem:[%s7 + $0xe0] sm:$0xff]
  %v1890 = vld [vmem:[%s7 + $0xe8] sm:$0xff]
  %v1891 = vld [vmem:[%s7 + $0xf0] sm:$0xff]
  %v1892 = vld [vmem:[%s7 + $0xf8] sm:$0xff]
  %v1893 = vld [vmem:[%s8] sm:$0x3]
  %v1895 = vlaneseq
  %v1896 = vshrl.u32 %v1895, 7
  %v1897 = vsub.s32 0, %v1896
  %v1898 = vrot.slane %v1893, %v1897
  %v1899 = vlaneseq
  %v1900 = vshrl.u32 %v1899, 7
  %v1901 = vsub.s32 1, %v1900
  %v1902 = vrot.slane %v1893, %v1901
  %1905 = vmatprep.subr.mxu0 %v1862
  %1906 = vmatpush1.msra.mxu0 %v1861
  %1907 = vmatprep.subr.mxu0 %v1864
  %1908 = vmatpush1.msra.mxu0 %v1863
  %1909 = vmatprep.subr.mxu0 %v1866
  %1910 = vmatpush1.msra.mxu0 %v1865
  %1911 = vmatprep.subr.mxu0 %v1868
  %1912 = vmatpush1.msra.mxu0 %v1867
  %1913 = vmatprep.subr.mxu0 %v1870
  %1914 = vmatpush1.msra.mxu0 %v1869
  %1915 = vmatprep.subr.mxu0 %v1872
  %1916 = vmatpush1.msra.mxu0 %v1871
  %1917 = vmatprep.subr.mxu0 %v1874
  %1918 = vmatpush1.msra.mxu0 %v1873
  %1919 = vmatprep.subr.mxu0 %v1876
  %1920 = vmatpush1.msra.mxu0 %v1875
  %1921 = vmatprep.subr.mxu0 %v1878
  %1922 = vmatpush1.msra.mxu0 %v1877
  %1923 = vmatprep.subr.mxu0 %v1880
  %1924 = vmatpush1.msra.mxu0 %v1879
  %1925 = vmatprep.subr.mxu0 %v1882
  %1926 = vmatpush1.msra.mxu0 %v1881
  %1927 = vmatprep.subr.mxu0 %v1884
  %1928 = vmatpush1.msra.mxu0 %v1883
  %1929 = vmatprep.subr.mxu0 %v1886
  %1930 = vmatpush1.msra.mxu0 %v1885
  %1931 = vmatprep.subr.mxu0 %v1888
  %1932 = vmatpush1.msra.mxu0 %v1887
  %1933 = vmatprep.subr.mxu0 %v1890
  %1934 = vmatpush1.msra.mxu0 %v1889
  %1935 = vmatprep.subr.mxu0 %v1892
  %1936 = vmatpush1.msra.mxu0 %v1891
  %1937 = vmatprep.subr.mxu0 0.0
  %1938 = vmatpush1.msra.mxu0 0.0
  %1939 = vmatprep.subr.mxu0 0.0
  %1940 = vmatpush1.msra.mxu0 0.0
  %1941 = vmatprep.subr.mxu0 0.0
  %1942 = vmatpush1.msra.mxu0 0.0
  %1943 = vmatprep.subr.mxu0 0.0
  %1944 = vmatpush1.msra.mxu0 0.0
  %1945 = vmatprep.subr.mxu0 0.0
  %1946 = vmatpush1.msra.mxu0 0.0
  %1947 = vmatprep.subr.mxu0 0.0
  %1948 = vmatpush1.msra.mxu0 0.0
  %1949 = vmatprep.subr.mxu0 0.0
  %1950 = vmatpush1.msra.mxu0 0.0
  %1951 = vmatprep.subr.mxu0 0.0
  %1952 = vmatpush1.msra.mxu0 0.0
  %1953 = vmatprep.subr.mxu0 0.0
  %1954 = vmatpush1.msra.mxu0 0.0
  %1955 = vmatprep.subr.mxu0 0.0
  %1956 = vmatpush1.msra.mxu0 0.0
  %1957 = vmatprep.subr.mxu0 0.0
  %1958 = vmatpush1.msra.mxu0 0.0
  %1959 = vmatprep.subr.mxu0 0.0
  %1960 = vmatpush1.msra.mxu0 0.0
  %1961 = vmatprep.subr.mxu0 0.0
  %1962 = vmatpush1.msra.mxu0 0.0
  %1963 = vmatprep.subr.mxu0 0.0
  %1964 = vmatpush1.msra.mxu0 0.0
  %1965 = vmatprep.subr.mxu0 0.0
  %1966 = vmatpush1.msra.mxu0 0.0
  %1967 = vmatprep.subr.mxu0 0.0
  %1968 = vmatpush1.msra.mxu0 0.0
  %1969 = vmatprep.mubr.f32.mxu0 0.0
  %1970 = vmatmul.mubr.f32.gmra.mrb[0].mxu0 %v660
  %v1971 = vpop.f32.mrb[0].mxu0
  %v1972 = vadd.f32 %v1898, %v1971
  %v1973 = vpop.f32.mrb[0].mxu0
  %v1974 = vadd.f32 %v1902, %v1973
  %1975 = vmatprep.mubr.f32.mxu0 0.0
  %1976 = vmatmul.mubr.f32.gmra.mrb[0].mxu0 %v832
  %v1977 = vpop.f32.mrb[0].mxu0
  %v1978 = vadd.f32 %v1898, %v1977
  %v1979 = vpop.f32.mrb[0].mxu0
  %v1980 = vadd.f32 %v1902, %v1979
  %1981 = vmatprep.mubr.f32.mxu0 0.0
  %1982 = vmatmul.mubr.f32.gmra.mrb[0].mxu0 %v1004
  %v1983 = vpop.f32.mrb[0].mxu0
  %v1984 = vadd.f32 %v1898, %v1983
  %v1985 = vpop.f32.mrb[0].mxu0
  %v1986 = vadd.f32 %v1902, %v1985
  %1987 = vmatprep.mubr.f32.mxu0 0.0
  %1988 = vmatmul.mubr.f32.gmra.mrb[0].mxu0 %v1176
  %v1989 = vpop.f32.mrb[0].mxu0
  %v1990 = vadd.f32 %v1898, %v1989
  %v1991 = vpop.f32.mrb[0].mxu0
  %v1992 = vadd.f32 %v1902, %v1991
  %1993 = vmatprep.mubr.f32.mxu0 0.0
  %1994 = vmatmul.mubr.f32.gmra.mrb[0].mxu0 %v1348
  %v1995 = vpop.f32.mrb[0].mxu0
  %v1996 = vadd.f32 %v1898, %v1995
  %v1997 = vpop.f32.mrb[0].mxu0
  %v1998 = vadd.f32 %v1902, %v1997
  %1999 = vmatprep.mubr.f32.mxu0 0.0
  %2000 = vmatmul.mubr.f32.gmra.mrb[0].mxu0 %v1520
  %v2001 = vpop.f32.mrb[0].mxu0
  %v2002 = vadd.f32 %v1898, %v2001
  %v2003 = vpop.f32.mrb[0].mxu0
  %v2004 = vadd.f32 %v1902, %v2003
  %2005 = vmatprep.mubr.f32.mxu0 0.0
  %2006 = vmatmul.mubr.f32.gmra.mrb[0].mxu0 %v1692
  %v2007 = vpop.f32.mrb[0].mxu0
  %v2008 = vadd.f32 %v1898, %v2007
  %v2009 = vpop.f32.mrb[0].mxu0
  %v2010 = vadd.f32 %v1902, %v2009
  %2011 = vmatprep.mubr.f32.mxu0 0.0
  %2012 = vmatmul.mubr.f32.gmra.mrb[0].mxu0 %v1860
  %v2013 = vpop.f32.mrb[0].mxu0
  %v2014 = vadd.f32 %v1898, %v2013
  %v2015 = vpop.f32.mrb[0].mxu0
  %v2016 = vadd.f32 %v1902, %v2015
  %2017 = vdwg.mxu0
  %v2018 = vmul.f32 %v1972, 0.5
  %v2019 = vmul.f32 %v1974, 0.5
  %v2020 = vmul.f32 %v1978, 0.5
  %v2021 = vmul.f32 %v1980, 0.5
  %v2022 = vmul.f32 %v1984, 0.5
  %v2023 = vmul.f32 %v1986, 0.5
  %v2024 = vmul.f32 %v1990, 0.5
  %v2025 = vmul.f32 %v1992, 0.5
  %v2026 = vmul.f32 %v1996, 0.5
  %v2027 = vmul.f32 %v1998, 0.5
  %v2028 = vmul.f32 %v2002, 0.5
  %v2029 = vmul.f32 %v2004, 0.5
  %v2030 = vmul.f32 %v2008, 0.5
  %v2031 = vmul.f32 %v2010, 0.5
  %v2032 = vmul.f32 %v2014, 0.5
  %v2033 = vmul.f32 %v2016, 0.5
  %v2034 = vtanh.pop %v2018
  %v2035 = vtanh.pop %v2019
  %v2036 = vtanh.pop %v2020
  %v2037 = vtanh.pop %v2021
  %v2038 = vtanh.pop %v2022
  %v2039 = vtanh.pop %v2023
  %v2040 = vtanh.pop %v2024
  %v2041 = vtanh.pop %v2025
  %v2042 = vtanh.pop %v2026
  %v2043 = vtanh.pop %v2027
  %v2044 = vtanh.pop %v2028
  %v2045 = vtanh.pop %v2029
  %v2046 = vtanh.pop %v2030
  %v2047 = vtanh.pop %v2031
  %v2048 = vtanh.pop %v2032
  %v2049 = vtanh.pop %v2033
  %v2050 = vmul.f32 %v2034, 0.5
  %v2051 = vmul.f32 %v2035, 0.5
  %v2052 = vmul.f32 %v2036, 0.5
  %v2053 = vmul.f32 %v2037, 0.5
  %v2054 = vmul.f32 %v2038, 0.5
  %v2055 = vmul.f32 %v2039, 0.5
  %v2056 = vmul.f32 %v2040, 0.5
  %v2057 = vmul.f32 %v2041, 0.5
  %v2058 = vmul.f32 %v2042, 0.5
  %v2059 = vmul.f32 %v2043, 0.5
  %v2060 = vmul.f32 %v2044, 0.5
  %v2061 = vmul.f32 %v2045, 0.5
  %v2062 = vmul.f32 %v2046, 0.5
  %v2063 = vmul.f32 %v2047, 0.5
  %v2064 = vmul.f32 %v2048, 0.5
  %v2065 = vmul.f32 %v2049, 0.5
  %v2066 = vadd.f32 %v2050, 0.5
  %v2067 = vadd.f32 %v2051, 0.5
  %v2068 = vadd.f32 %v2052, 0.5
  %v2069 = vadd.f32 %v2053, 0.5
  %v2070 = vadd.f32 %v2054, 0.5
  %v2071 = vadd.f32 %v2055, 0.5
  %v2072 = vadd.f32 %v2056, 0.5
  %v2073 = vadd.f32 %v2057, 0.5
  %v2074 = vadd.f32 %v2058, 0.5
  %v2075 = vadd.f32 %v2059, 0.5
  %v2076 = vadd.f32 %v2060, 0.5
  %v2077 = vadd.f32 %v2061, 0.5
  %v2078 = vadd.f32 %v2062, 0.5
  %v2079 = vadd.f32 %v2063, 0.5
  %v2080 = vadd.f32 %v2064, 0.5
  %v2081 = vadd.f32 %v2065, 0.5
  %2082 = vst [vmem:[%s9] sm:$0xff] %v2066
  %2083 = vst [vmem:[%s9 + $0x8] sm:$0xff] %v2067
  %2084 = vst [vmem:[%s9 + $0x10] sm:$0xff] %v2068
  %2085 = vst [vmem:[%s9 + $0x18] sm:$0xff] %v2069
  %2086 = vst [vmem:[%s9 + $0x20] sm:$0xff] %v2070
  %2087 = vst [vmem:[%s9 + $0x28] sm:$0xff] %v2071
  %2088 = vst [vmem:[%s9 + $0x30] sm:$0xff] %v2072
  %2089 = vst [vmem:[%s9 + $0x38] sm:$0xff] %v2073
  %2090 = vst [vmem:[%s9 + $0x40] sm:$0xff] %v2074
  %2091 = vst [vmem:[%s9 + $0x48] sm:$0xff] %v2075
  %2092 = vst [vmem:[%s9 + $0x50] sm:$0xff] %v2076
  %2093 = vst [vmem:[%s9 + $0x58] sm:$0xff] %v2077
  %2094 = vst [vmem:[%s9 + $0x60] sm:$0xff] %v2078
  %2095 = vst [vmem:[%s9 + $0x68] sm:$0xff] %v2079
  %2096 = vst [vmem:[%s9 + $0x70] sm:$0xff] %v2080
  %2097 = vst [vmem:[%s9 + $0x78] sm:$0xff] %v2081
  // Predicated region
  $region38: #{encoder_decoder_forward.1} parent=0 // pred_check
    _
  $region39: #{encoder_decoder_forward.1} parent=0 // pred_check_branch
    %2099 = sbr.rel (0) target = $region41
  $region40: #{encoder_decoder_forward.1} parent=0 // pred_region
    _
  $region41: #{encoder_decoder_forward.1} parent=0 // pred_fallthru
    _
  // Predicated region
  $region42: #{encoder_decoder_forward.1} parent=0 // pred_check
    _
  $region43: #{encoder_decoder_forward.1} parent=0 // pred_check_branch
    %2101 = sbr.rel (0) target = $region45
  $region44: #{encoder_decoder_forward.1} parent=0 // pred_region
    _
  $region45: #{encoder_decoder_forward.1} parent=0 // pred_fallthru
    _

</llo_original>
